<compile_context>
chip_gen: v5e
topology: v5e:2x2
jax: 0.10.0
libtpu: 0.0.40
codegen_flags: <defaults>
</compile_context>

<pallas_src>
import math
import functools

import jax
import jax.numpy as jnp
from jax.experimental import pallas as pl
from jax.experimental.pallas import tpu as pltpu


# ----------------------------------------------------------------------------
# In-kernel helpers
# ----------------------------------------------------------------------------
def _gelu_tanh(x):
    # TODO(synk): F.gelu default is exact erf-GELU; tanh approximation used here
    # because erf has no guaranteed Mosaic lowering (drift ~1e-3).
    c = math.sqrt(2.0 / math.pi)
    return 0.5 * x * (1.0 + jnp.tanh(c * (x + 0.044715 * x * x * x)))


def _layernorm(x, g, b, eps=1e-5):
    mean = jnp.mean(x, axis=-1, keepdims=True)
    xc = x - mean
    var = jnp.mean(xc * xc, axis=-1, keepdims=True)
    return (xc * jax.lax.rsqrt(var + eps)) * g + b


# ----------------------------------------------------------------------------
# Fused full-model kernel (one grid step == one transformer block)
# ----------------------------------------------------------------------------
def _gpt_kernel(obs_ref, pos_ref, bias_ref,
                wobs_ref, bobs_ref,
                ln1g_ref, ln1b_ref, wqkv_ref, bqkv_ref, wproj_ref, bproj_ref,
                ln2g_ref, ln2b_ref, wfc1_ref, bfc1_ref, wfc2_ref, bfc2_ref,
                lnfg_ref, lnfb_ref, whead_ref, bhead_ref,
                o_ref,
                x_vmem,
                *, n_embd, n_head):
    C = n_embd
    H = n_head
    hd = C // H
    scale = 1.0 / math.sqrt(hd)
    layer = pl.program_id(0)
    n_layer = pl.num_programs(0)

    # ---- embedding: obs_emb(Linear+Tanh) + pos_emb, only on first grid step ----
    @pl.when(layer == 0)
    def _():
        tok = jnp.dot(obs_ref[...], wobs_ref[...],
                      preferred_element_type=jnp.float32) + bobs_ref[...]
        x_vmem[...] = jnp.tanh(tok) + pos_ref[...]      # embd drop = identity (eval)

    x = x_vmem[...]                                     # (BT, C), VMEM-resident

    # ---- attention sub-block: LN -> fused QKV -> per-head attn -> proj ----
    h = _layernorm(x, ln1g_ref[0], ln1b_ref[0])
    qkv = jnp.dot(h, wqkv_ref[0],
                  preferred_element_type=jnp.float32) + bqkv_ref[0]   # (BT, 3C)
    bias = bias_ref[...]                                # (BT, BT) causal+batch mask

    heads = []
    for hi in range(H):                                 # static unroll over heads
        q_h = qkv[:, hi * hd:(hi + 1) * hd]
        k_h = qkv[:, C + hi * hd:C + (hi + 1) * hd]
        v_h = qkv[:, 2 * C + hi * hd:2 * C + (hi + 1) * hd]
        # q @ k.T without an explicit transpose (contract last dims)
        s = jax.lax.dot_general(q_h, k_h, (((1,), (1,)), ((), ())),
                                preferred_element_type=jnp.float32)
        s = s * scale + bias
        s = s - jnp.max(s, axis=-1, keepdims=True)
        e = jnp.exp(s)
        p = e * pl.reciprocal(jnp.sum(e, axis=-1, keepdims=True), approx=True)
        heads.append(jnp.dot(p, v_h, preferred_element_type=jnp.float32))
    y = jnp.concatenate(heads, axis=-1)                 # == merge_heads, (BT, C)
    attn_out = jnp.dot(y, wproj_ref[0],
                       preferred_element_type=jnp.float32) + bproj_ref[0]
    x = x + attn_out                                    # attn/resid drop = identity

    # ---- MLP sub-block ----
    h2 = _layernorm(x, ln2g_ref[0], ln2b_ref[0])
    m = _gelu_tanh(jnp.dot(h2, wfc1_ref[0],
                           preferred_element_type=jnp.float32) + bfc1_ref[0])
    x = x + jnp.dot(m, wfc2_ref[0],
                    preferred_element_type=jnp.float32) + bfc2_ref[0]
    x_vmem[...] = x                                     # carry to next layer

    # ---- final LayerNorm + head(Linear+Tanh), only on last grid step ----
    @pl.when(layer == n_layer - 1)
    def _():
        xf = _layernorm(x, lnfg_ref[...], lnfb_ref[...])
        logits = jnp.tanh(jnp.dot(xf, whead_ref[...],
                                  preferred_element_type=jnp.float32) + bhead_ref[...])
        o_ref[...] = logits.astype(o_ref.dtype)


# ----------------------------------------------------------------------------
# Wrapper: pack weights, build masks, call the fused kernel once
# ----------------------------------------------------------------------------
def gpt_forward(params, obs, cfg):
    B, T, D = obs.shape
    assert D == cfg["feature_dim"]
    C, H, L, V = cfg["n_embd"], cfg["n_head"], cfg["n_layer"], cfg["vocab_size"]
    BT = B * T

    obs2d = obs.reshape(BT, D).astype(jnp.float32)
    pos2d = jnp.broadcast_to(params["pos_emb"][0, :T, :],
                             (B, T, C)).reshape(BT, C).astype(jnp.float32)

    # block-diagonal (per batch) causal additive mask on the flat token axis
    rows = jnp.arange(BT)
    b_i, t_i = rows // T, rows % T
    allowed = (b_i[:, None] == b_i[None, :]) & (t_i[None, :] <= t_i[:, None])
    attn_bias = jnp.where(allowed, 0.0, -1e30).astype(jnp.float32)

    blocks = params["blocks"]
    stk = lambda fn: jnp.stack([fn(b) for b in blocks], axis=0)
    ln1g = stk(lambda b: b["ln1_g"].reshape(1, C))
    ln1b = stk(lambda b: b["ln1_b"].reshape(1, C))
    wqkv = stk(lambda b: jnp.concatenate([b["q_w"], b["k_w"], b["v_w"]], axis=1))
    bqkv = stk(lambda b: jnp.concatenate([b["q_b"], b["k_b"], b["v_b"]]).reshape(1, 3 * C))
    wproj = stk(lambda b: b["proj_w"])
    bproj = stk(lambda b: b["proj_b"].reshape(1, C))
    ln2g = stk(lambda b: b["ln2_g"].reshape(1, C))
    ln2b = stk(lambda b: b["ln2_b"].reshape(1, C))
    wfc1 = stk(lambda b: b["fc1_w"])
    bfc1 = stk(lambda b: b["fc1_b"].reshape(1, 4 * C))
    wfc2 = stk(lambda b: b["fc2_w"])
    bfc2 = stk(lambda b: b["fc2_b"].reshape(1, C))

    wobs, bobs = params["obs_w"], params["obs_b"].reshape(1, C)
    lnfg, lnfb = params["lnf_g"].reshape(1, C), params["lnf_b"].reshape(1, C)
    whead, bhead = params["head_w"], params["head_b"].reshape(1, V)

    def full2(shape):               # layer-invariant: same block every grid step
        return pl.BlockSpec(shape, lambda l: (0, 0))

    def per_layer(shape):           # per-layer stacked weights: block index = layer
        return pl.BlockSpec(shape, lambda l: (l, 0, 0))

    in_specs = [
        full2((BT, D)),             # obs
        full2((BT, C)),             # pos
        full2((BT, BT)),            # attn bias
        full2((D, C)),              # obs_emb W
        full2((1, C)),              # obs_emb b
        per_layer((1, 1, C)),       # ln1 g
        per_layer((1, 1, C)),       # ln1 b
        per_layer((1, C, 3 * C)),   # fused QKV W
        per_layer((1, 1, 3 * C)),   # fused QKV b
        per_layer((1, C, C)),       # proj W
        per_layer((1, 1, C)),       # proj b
        per_layer((1, 1, C)),       # ln2 g
        per_layer((1, 1, C)),       # ln2 b
        per_layer((1, C, 4 * C)),   # fc1 W
        per_layer((1, 1, 4 * C)),   # fc1 b
        per_layer((1, 4 * C, C)),   # fc2 W
        per_layer((1, 1, C)),       # fc2 b
        full2((1, C)),              # ln_f g
        full2((1, C)),              # ln_f b
        full2((C, V)),              # head W
        full2((1, V)),              # head b
    ]
    out_spec = full2((BT, V))

    logits = pl.pallas_call(
        functools.partial(_gpt_kernel, n_embd=C, n_head=H),
        out_shape=jax.ShapeDtypeStruct((BT, V), jnp.float32),
        grid_spec=pltpu.PrefetchScalarGridSpec(
            num_scalar_prefetch=0,
            grid=(L,),
            in_specs=in_specs,
            out_specs=out_spec,
            scratch_shapes=[pltpu.VMEM((BT, C), jnp.float32)],
        ),
        compiler_params=pltpu.CompilerParams(
            dimension_semantics=("arbitrary",),
            vmem_limit_bytes=64 << 20),
    )(obs2d, pos2d, attn_bias,
      wobs, bobs,
      ln1g, ln1b, wqkv, bqkv, wproj, bproj,
      ln2g, ln2b, wfc1, bfc1, wfc2, bfc2,
      lnfg, lnfb, whead, bhead)
    return logits                   # (B*T, vocab_size)  -- DEPRECATED=True branch


# ----------------------------------------------------------------------------
# Pure-JAX reference (same math, exact division) for self-validation
# ----------------------------------------------------------------------------
def gpt_forward_ref(params, obs, cfg):
    B, T, D = obs.shape
    C, H = cfg["n_embd"], cfg["n_head"]
    hd = C // H

    def ln(x, g, b):
        m = x.mean(-1, keepdims=True)
        v = ((x - m) ** 2).mean(-1, keepdims=True)
        return (x - m) / jnp.sqrt(v + 1e-5) * g + b

    x = jnp.tanh(obs @ params["obs_w"] + params["obs_b"]) + params["pos_emb"][:, :T, :]
    mask = jnp.tril(jnp.ones((T, T), bool))
    for blk in params["blocks"]:
        h = ln(x, blk["ln1_g"], blk["ln1_b"])
        q = (h @ blk["q_w"] + blk["q_b"]).reshape(B, T, H, hd).transpose(0, 2, 1, 3)
        k = (h @ blk["k_w"] + blk["k_b"]).reshape(B, T, H, hd).transpose(0, 2, 1, 3)
        v = (h @ blk["v_w"] + blk["v_b"]).reshape(B, T, H, hd).transpose(0, 2, 1, 3)
        att = jnp.einsum("bhtd,bhsd->bhts", q, k) / math.sqrt(hd)
        att = jnp.where(mask[None, None], att, -jnp.inf)
        att = jax.nn.softmax(att, axis=-1)
        y = jnp.einsum("bhts,bhsd->bhtd", att, v).transpose(0, 2, 1, 3).reshape(B, T, C)
        x = x + (y @ blk["proj_w"] + blk["proj_b"])
        h2 = ln(x, blk["ln2_g"], blk["ln2_b"])
        m = _gelu_tanh(h2 @ blk["fc1_w"] + blk["fc1_b"])
        x = x + (m @ blk["fc2_w"] + blk["fc2_b"])
    x = ln(x, params["lnf_g"], params["lnf_b"])
    logits = jnp.tanh(x @ params["head_w"] + params["head_b"])
    return logits.reshape(B * T, cfg["vocab_size"])


# ----------------------------------------------------------------------------
# Parameters (deterministic in-script init mirroring GPT.__init__ shapes)
# ----------------------------------------------------------------------------
def init_params(key, cfg):
    C, V, D, L = cfg["n_embd"], cfg["vocab_size"], cfg["feature_dim"], cfg["n_layer"]
    keys = iter(jax.random.split(key, 8 * L + 8))

    def w(cin, cout):
        return 0.02 * jax.random.normal(next(keys), (cin, cout), jnp.float32)

    z = lambda n: jnp.zeros((n,), jnp.float32)
    o = lambda n: jnp.ones((n,), jnp.float32)

    p = {
        "obs_w": w(D, C), "obs_b": z(C),                # obs_emb: Linear(D,C)+Tanh
        # torch inits pos_emb to zeros; small random here keeps the test non-trivial
        "pos_emb": 0.02 * jax.random.normal(next(keys),
                                            (1, cfg["block_size"] + 1, C), jnp.float32),
        "lnf_g": o(C), "lnf_b": z(C),
        "head_w": w(C, V), "head_b": z(V),              # head: Linear(C,V)+Tanh
        "blocks": [],
    }
    for _ in range(L):
        p["blocks"].append({
            "ln1_g": o(C), "ln1_b": z(C),
            "q_w": w(C, C), "q_b": z(C),
            "k_w": w(C, C), "k_b": z(C),
            "v_w": w(C, C), "v_b": z(C),
            "proj_w": w(C, C), "proj_b": z(C),
            "ln2_g": o(C), "ln2_b": z(C),
            "fc1_w": w(C, 4 * C), "fc1_b": z(4 * C),
            "fc2_w": w(4 * C, C), "fc2_b": z(C),
        })
    return p


# ----------------------------------------------------------------------------
if __name__ == "__main__":
    cfg = dict(feature_dim=16, n_embd=32, n_head=4, n_layer=2,
               vocab_size=128, block_size=8)
    B, T = 2, 8

    key = jax.random.PRNGKey(0)
    k_param, k_obs = jax.random.split(key)
    params = init_params(k_param, cfg)
    obs = jax.random.normal(k_obs, (B, T, cfg["feature_dim"]), dtype=jnp.float32)
    actions = None  # model_actions = False

    logits = gpt_forward(params, obs, cfg)
    logits = jax.block_until_ready(logits)

    assert logits.shape == (B * T, cfg["vocab_size"]), logits.shape
    assert logits.dtype == jnp.float32
    assert bool(jnp.all(jnp.isfinite(logits)))

    ref = gpt_forward_ref(params, obs, cfg)
    diff = float(jnp.max(jnp.abs(logits - ref)))
    assert diff < 2e-2, f"mismatch vs pure-JAX reference: {diff}"

    print("KERNEL_OK")
</pallas_src>

<mosaic_0001>
module attributes {stable_mosaic.version = 11 : i64} {
  func.func @_gpt_kernel(%arg0: i32, %arg1: memref<16x16xf32, #tpu.memory_space<vmem>>, %arg2: memref<16x32xf32, #tpu.memory_space<vmem>>, %arg3: memref<16x16xf32, #tpu.memory_space<vmem>>, %arg4: memref<16x32xf32, #tpu.memory_space<vmem>>, %arg5: memref<1x32xf32, #tpu.memory_space<vmem>>, %arg6: memref<1x1x32xf32, #tpu.memory_space<vmem>>, %arg7: memref<1x1x32xf32, #tpu.memory_space<vmem>>, %arg8: memref<1x32x96xf32, #tpu.memory_space<vmem>>, %arg9: memref<1x1x96xf32, #tpu.memory_space<vmem>>, %arg10: memref<1x32x32xf32, #tpu.memory_space<vmem>>, %arg11: memref<1x1x32xf32, #tpu.memory_space<vmem>>, %arg12: memref<1x1x32xf32, #tpu.memory_space<vmem>>, %arg13: memref<1x1x32xf32, #tpu.memory_space<vmem>>, %arg14: memref<1x32x128xf32, #tpu.memory_space<vmem>>, %arg15: memref<1x1x128xf32, #tpu.memory_space<vmem>>, %arg16: memref<1x128x32xf32, #tpu.memory_space<vmem>>, %arg17: memref<1x1x32xf32, #tpu.memory_space<vmem>>, %arg18: memref<1x32xf32, #tpu.memory_space<vmem>>, %arg19: memref<1x32xf32, #tpu.memory_space<vmem>>, %arg20: memref<32x128xf32, #tpu.memory_space<vmem>>, %arg21: memref<1x128xf32, #tpu.memory_space<vmem>>, %arg22: memref<16x128xf32, #tpu.memory_space<vmem>>, %arg23: memref<16x32xf32, #tpu.memory_space<vmem>>) attributes {dimension_semantics = [#tpu.dimension_semantics<arbitrary>], iteration_bounds = array<i64: 2>, scalar_prefetch = 0 : i64, scratch_operands = 1 : i64, tpu.core_type = #tpu.core_type<tc>, window_params = [{pipeline_mode = #tpu.pipeline_mode<synchronous>, transform_indices = @transform_0, window_bounds = array<i64: 16, 16>}, {pipeline_mode = #tpu.pipeline_mode<synchronous>, transform_indices = @transform_1, window_bounds = array<i64: 16, 32>}, {pipeline_mode = #tpu.pipeline_mode<synchronous>, transform_indices = @transform_2, window_bounds = array<i64: 16, 16>}, {pipeline_mode = #tpu.pipeline_mode<synchronous>, transform_indices = @transform_3, window_bounds = array<i64: 16, 32>}, {pipeline_mode = #tpu.pipeline_mode<synchronous>, transform_indices = @transform_4, window_bounds = array<i64: 1, 32>}, {transform_indices = @transform_5, window_bounds = array<i64: 1, 1, 32>}, {transform_indices = @transform_6, window_bounds = array<i64: 1, 1, 32>}, {transform_indices = @transform_7, window_bounds = array<i64: 1, 32, 96>}, {transform_indices = @transform_8, window_bounds = array<i64: 1, 1, 96>}, {transform_indices = @transform_9, window_bounds = array<i64: 1, 32, 32>}, {transform_indices = @transform_10, window_bounds = array<i64: 1, 1, 32>}, {transform_indices = @transform_11, window_bounds = array<i64: 1, 1, 32>}, {transform_indices = @transform_12, window_bounds = array<i64: 1, 1, 32>}, {transform_indices = @transform_13, window_bounds = array<i64: 1, 32, 128>}, {transform_indices = @transform_14, window_bounds = array<i64: 1, 1, 128>}, {transform_indices = @transform_15, window_bounds = array<i64: 1, 128, 32>}, {transform_indices = @transform_16, window_bounds = array<i64: 1, 1, 32>}, {pipeline_mode = #tpu.pipeline_mode<synchronous>, transform_indices = @transform_17, window_bounds = array<i64: 1, 32>}, {pipeline_mode = #tpu.pipeline_mode<synchronous>, transform_indices = @transform_18, window_bounds = array<i64: 1, 32>}, {pipeline_mode = #tpu.pipeline_mode<synchronous>, transform_indices = @transform_19, window_bounds = array<i64: 32, 128>}, {pipeline_mode = #tpu.pipeline_mode<synchronous>, transform_indices = @transform_20, window_bounds = array<i64: 1, 128>}, {pipeline_mode = #tpu.pipeline_mode<synchronous>, transform_indices = @transform_21, window_bounds = array<i64: 16, 128>}]} {
    %c0_i32 = arith.constant 0 : i32
    %0 = arith.cmpi eq, %arg0, %c0_i32 : i32
    %1 = arith.extui %0 : i1 to i32
    %c0_i32_0 = arith.constant 0 : i32
    %2 = arith.cmpi ne, %1, %c0_i32_0 : i32
    scf.if %2 {
      %c0_80 = arith.constant 0 : index
      %c0_81 = arith.constant 0 : index
      %173 = vector.load %arg1[%c0_80, %c0_81] : memref<16x16xf32, #tpu.memory_space<vmem>>, vector<16x16xf32>
      %c0_82 = arith.constant 0 : index
      %c0_83 = arith.constant 0 : index
      %174 = vector.load %arg4[%c0_82, %c0_83] : memref<16x32xf32, #tpu.memory_space<vmem>>, vector<16x32xf32>
      %cst_84 = arith.constant dense<0.000000e+00> : vector<16x32xf32>
      %175 = tpu.matmul %173, %174, %cst_84 {dimension_numbers = #tpu.dot_dimension_numbers<[1], [0], [0], [1], [0, 0, 1, 1], [], []>} : vector<16x16xf32>, vector<16x32xf32>, vector<16x32xf32> -> vector<16x32xf32>
      %c0_85 = arith.constant 0 : index
      %c0_86 = arith.constant 0 : index
      %176 = vector.load %arg5[%c0_85, %c0_86] : memref<1x32xf32, #tpu.memory_space<vmem>>, vector<1x32xf32>
      %177 = vector.broadcast %176 : vector<1x32xf32> to vector<16x32xf32>
      %178 = arith.addf %175, %177 : vector<16x32xf32>
      %179 = math.tanh %178 : vector<16x32xf32>
      %c0_87 = arith.constant 0 : index
      %c0_88 = arith.constant 0 : index
      %180 = vector.load %arg2[%c0_87, %c0_88] : memref<16x32xf32, #tpu.memory_space<vmem>>, vector<16x32xf32>
      %181 = arith.addf %179, %180 : vector<16x32xf32>
      %c0_89 = arith.constant 0 : index
      %c0_90 = arith.constant 0 : index
      %182 = vector.load %arg23[%c0_89, %c0_90] : memref<16x32xf32, #tpu.memory_space<vmem>>, vector<16x32xf32>
      tpu.vector_store %arg23[%c0_89, %c0_90], %181 {strides = array<i32>} : memref<16x32xf32, #tpu.memory_space<vmem>>, vector<16x32xf32>,
    } else {
    }
    %c0 = arith.constant 0 : index
    %c0_1 = arith.constant 0 : index
    %3 = vector.load %arg23[%c0, %c0_1] : memref<16x32xf32, #tpu.memory_space<vmem>>, vector<16x32xf32>
    %c0_2 = arith.constant 0 : index
    %c0_3 = arith.constant 0 : index
    %c0_4 = arith.constant 0 : index
    %4 = vector.load %arg6[%c0_2, %c0_3, %c0_4] : memref<1x1x32xf32, #tpu.memory_space<vmem>>, vector<1x1x32xf32>
    %5 = vector.shape_cast %4 : vector<1x1x32xf32> to vector<1x32xf32>
    %c0_5 = arith.constant 0 : index
    %c0_6 = arith.constant 0 : index
    %c0_7 = arith.constant 0 : index
    %6 = vector.load %arg7[%c0_5, %c0_6, %c0_7] : memref<1x1x32xf32, #tpu.memory_space<vmem>>, vector<1x1x32xf32>
    %7 = vector.shape_cast %6 : vector<1x1x32xf32> to vector<1x32xf32>
    %cst = arith.constant dense<0.000000e+00> : vector<16xf32>
    %8 = vector.multi_reduction <add>, %3, %cst [1] : vector<16x32xf32> to vector<16xf32>
    %9 = vector.shape_cast %8 : vector<16xf32> to vector<16x1xf32>
    %cst_8 = arith.constant 3.200000e+01 : f32
    %10 = vector.broadcast %cst_8 : f32 to vector<16x1xf32>
    %11 = arith.divf %9, %10 : vector<16x1xf32>
    %12 = vector.broadcast %11 : vector<16x1xf32> to vector<16x32xf32>
    %13 = arith.subf %3, %12 : vector<16x32xf32>
    %14 = arith.mulf %13, %13 : vector<16x32xf32>
    %cst_9 = arith.constant dense<0.000000e+00> : vector<16xf32>
    %15 = vector.multi_reduction <add>, %14, %cst_9 [1] : vector<16x32xf32> to vector<16xf32>
    %16 = vector.shape_cast %15 : vector<16xf32> to vector<16x1xf32>
    %cst_10 = arith.constant 3.200000e+01 : f32
    %17 = vector.broadcast %cst_10 : f32 to vector<16x1xf32>
    %18 = arith.divf %16, %17 : vector<16x1xf32>
    %cst_11 = arith.constant 9.99999974E-6 : f32
    %19 = vector.broadcast %cst_11 : f32 to vector<16x1xf32>
    %20 = arith.addf %18, %19 : vector<16x1xf32>
    %21 = math.rsqrt %20 : vector<16x1xf32>
    %22 = vector.broadcast %21 : vector<16x1xf32> to vector<16x32xf32>
    %23 = arith.mulf %13, %22 : vector<16x32xf32>
    %24 = vector.broadcast %5 : vector<1x32xf32> to vector<16x32xf32>
    %25 = arith.mulf %23, %24 : vector<16x32xf32>
    %26 = vector.broadcast %7 : vector<1x32xf32> to vector<16x32xf32>
    %27 = arith.addf %25, %26 : vector<16x32xf32>
    %c0_12 = arith.constant 0 : index
    %c0_13 = arith.constant 0 : index
    %c0_14 = arith.constant 0 : index
    %28 = vector.load %arg8[%c0_12, %c0_13, %c0_14] : memref<1x32x96xf32, #tpu.memory_space<vmem>>, vector<1x32x96xf32>
    %29 = vector.shape_cast %28 : vector<1x32x96xf32> to vector<32x96xf32>
    %cst_15 = arith.constant dense<0.000000e+00> : vector<16x96xf32>
    %30 = tpu.matmul %27, %29, %cst_15 {dimension_numbers = #tpu.dot_dimension_numbers<[1], [0], [0], [1], [0, 0, 1, 1], [], []>} : vector<16x32xf32>, vector<32x96xf32>, vector<16x96xf32> -> vector<16x96xf32>
    %c0_16 = arith.constant 0 : index
    %c0_17 = arith.constant 0 : index
    %c0_18 = arith.constant 0 : index
    %31 = vector.load %arg9[%c0_16, %c0_17, %c0_18] : memref<1x1x96xf32, #tpu.memory_space<vmem>>, vector<1x1x96xf32>
    %32 = vector.shape_cast %31 : vector<1x1x96xf32> to vector<1x96xf32>
    %33 = vector.broadcast %32 : vector<1x96xf32> to vector<16x96xf32>
    %34 = arith.addf %30, %33 : vector<16x96xf32>
    %c0_19 = arith.constant 0 : index
    %c0_20 = arith.constant 0 : index
    %35 = vector.load %arg3[%c0_19, %c0_20] : memref<16x16xf32, #tpu.memory_space<vmem>>, vector<16x16xf32>
    %36 = vector.extract_strided_slice %34 {offsets = [0, 0], sizes = [16, 8], strides = [1, 1]} : vector<16x96xf32> to vector<16x8xf32>
    %37 = vector.extract_strided_slice %34 {offsets = [0, 32], sizes = [16, 8], strides = [1, 1]} : vector<16x96xf32> to vector<16x8xf32>
    %38 = vector.extract_strided_slice %34 {offsets = [0, 64], sizes = [16, 8], strides = [1, 1]} : vector<16x96xf32> to vector<16x8xf32>
    %cst_21 = arith.constant dense<0.000000e+00> : vector<16x16xf32>
    %39 = tpu.matmul %36, %37, %cst_21 {dimension_numbers = #tpu.dot_dimension_numbers<[1], [1], [0], [0], [0, 0, 1, 0], [], []>} : vector<16x8xf32>, vector<16x8xf32>, vector<16x16xf32> -> vector<16x16xf32>
    %cst_22 = arith.constant 0.353553385 : f32
    %40 = vector.broadcast %cst_22 : f32 to vector<16x16xf32>
    %41 = arith.mulf %39, %40 : vector<16x16xf32>
    %42 = arith.addf %41, %35 : vector<16x16xf32>
    %cst_23 = arith.constant dense<0xFF800000> : vector<16xf32>
    %43 = vector.multi_reduction <maximumf>, %42, %cst_23 [1] : vector<16x16xf32> to vector<16xf32>
    %44 = vector.shape_cast %43 : vector<16xf32> to vector<16x1xf32>
    %45 = vector.broadcast %44 : vector<16x1xf32> to vector<16x16xf32>
    %46 = arith.subf %42, %45 : vector<16x16xf32>
    %47 = math.exp %46 : vector<16x16xf32>
    %cst_24 = arith.constant dense<0.000000e+00> : vector<16xf32>
    %48 = vector.multi_reduction <add>, %47, %cst_24 [1] : vector<16x16xf32> to vector<16xf32>
    %49 = vector.shape_cast %48 : vector<16xf32> to vector<16x1xf32>
    %50 = tpu.reciprocal %49 {approx = true} : vector<16x1xf32> -> vector<16x1xf32>
    %51 = vector.broadcast %50 : vector<16x1xf32> to vector<16x16xf32>
    %52 = arith.mulf %47, %51 : vector<16x16xf32>
    %cst_25 = arith.constant dense<0.000000e+00> : vector<16x8xf32>
    %53 = tpu.matmul %52, %38, %cst_25 {dimension_numbers = #tpu.dot_dimension_numbers<[1], [0], [0], [1], [0, 0, 1, 1], [], []>} : vector<16x16xf32>, vector<16x8xf32>, vector<16x8xf32> -> vector<16x8xf32>
    %54 = vector.extract_strided_slice %34 {offsets = [0, 8], sizes = [16, 8], strides = [1, 1]} : vector<16x96xf32> to vector<16x8xf32>
    %55 = vector.extract_strided_slice %34 {offsets = [0, 40], sizes = [16, 8], strides = [1, 1]} : vector<16x96xf32> to vector<16x8xf32>
    %56 = vector.extract_strided_slice %34 {offsets = [0, 72], sizes = [16, 8], strides = [1, 1]} : vector<16x96xf32> to vector<16x8xf32>
    %cst_26 = arith.constant dense<0.000000e+00> : vector<16x16xf32>
    %57 = tpu.matmul %54, %55, %cst_26 {dimension_numbers = #tpu.dot_dimension_numbers<[1], [1], [0], [0], [0, 0, 1, 0], [], []>} : vector<16x8xf32>, vector<16x8xf32>, vector<16x16xf32> -> vector<16x16xf32>
    %cst_27 = arith.constant 0.353553385 : f32
    %58 = vector.broadcast %cst_27 : f32 to vector<16x16xf32>
    %59 = arith.mulf %57, %58 : vector<16x16xf32>
    %60 = arith.addf %59, %35 : vector<16x16xf32>
    %cst_28 = arith.constant dense<0xFF800000> : vector<16xf32>
    %61 = vector.multi_reduction <maximumf>, %60, %cst_28 [1] : vector<16x16xf32> to vector<16xf32>
    %62 = vector.shape_cast %61 : vector<16xf32> to vector<16x1xf32>
    %63 = vector.broadcast %62 : vector<16x1xf32> to vector<16x16xf32>
    %64 = arith.subf %60, %63 : vector<16x16xf32>
    %65 = math.exp %64 : vector<16x16xf32>
    %cst_29 = arith.constant dense<0.000000e+00> : vector<16xf32>
    %66 = vector.multi_reduction <add>, %65, %cst_29 [1] : vector<16x16xf32> to vector<16xf32>
    %67 = vector.shape_cast %66 : vector<16xf32> to vector<16x1xf32>
    %68 = tpu.reciprocal %67 {approx = true} : vector<16x1xf32> -> vector<16x1xf32>
    %69 = vector.broadcast %68 : vector<16x1xf32> to vector<16x16xf32>
    %70 = arith.mulf %65, %69 : vector<16x16xf32>
    %cst_30 = arith.constant dense<0.000000e+00> : vector<16x8xf32>
    %71 = tpu.matmul %70, %56, %cst_30 {dimension_numbers = #tpu.dot_dimension_numbers<[1], [0], [0], [1], [0, 0, 1, 1], [], []>} : vector<16x16xf32>, vector<16x8xf32>, vector<16x8xf32> -> vector<16x8xf32>
    %72 = vector.extract_strided_slice %34 {offsets = [0, 16], sizes = [16, 8], strides = [1, 1]} : vector<16x96xf32> to vector<16x8xf32>
    %73 = vector.extract_strided_slice %34 {offsets = [0, 48], sizes = [16, 8], strides = [1, 1]} : vector<16x96xf32> to vector<16x8xf32>
    %74 = vector.extract_strided_slice %34 {offsets = [0, 80], sizes = [16, 8], strides = [1, 1]} : vector<16x96xf32> to vector<16x8xf32>
    %cst_31 = arith.constant dense<0.000000e+00> : vector<16x16xf32>
    %75 = tpu.matmul %72, %73, %cst_31 {dimension_numbers = #tpu.dot_dimension_numbers<[1], [1], [0], [0], [0, 0, 1, 0], [], []>} : vector<16x8xf32>, vector<16x8xf32>, vector<16x16xf32> -> vector<16x16xf32>
    %cst_32 = arith.constant 0.353553385 : f32
    %76 = vector.broadcast %cst_32 : f32 to vector<16x16xf32>
    %77 = arith.mulf %75, %76 : vector<16x16xf32>
    %78 = arith.addf %77, %35 : vector<16x16xf32>
    %cst_33 = arith.constant dense<0xFF800000> : vector<16xf32>
    %79 = vector.multi_reduction <maximumf>, %78, %cst_33 [1] : vector<16x16xf32> to vector<16xf32>
    %80 = vector.shape_cast %79 : vector<16xf32> to vector<16x1xf32>
    %81 = vector.broadcast %80 : vector<16x1xf32> to vector<16x16xf32>
    %82 = arith.subf %78, %81 : vector<16x16xf32>
    %83 = math.exp %82 : vector<16x16xf32>
    %cst_34 = arith.constant dense<0.000000e+00> : vector<16xf32>
    %84 = vector.multi_reduction <add>, %83, %cst_34 [1] : vector<16x16xf32> to vector<16xf32>
    %85 = vector.shape_cast %84 : vector<16xf32> to vector<16x1xf32>
    %86 = tpu.reciprocal %85 {approx = true} : vector<16x1xf32> -> vector<16x1xf32>
    %87 = vector.broadcast %86 : vector<16x1xf32> to vector<16x16xf32>
    %88 = arith.mulf %83, %87 : vector<16x16xf32>
    %cst_35 = arith.constant dense<0.000000e+00> : vector<16x8xf32>
    %89 = tpu.matmul %88, %74, %cst_35 {dimension_numbers = #tpu.dot_dimension_numbers<[1], [0], [0], [1], [0, 0, 1, 1], [], []>} : vector<16x16xf32>, vector<16x8xf32>, vector<16x8xf32> -> vector<16x8xf32>
    %90 = vector.extract_strided_slice %34 {offsets = [0, 24], sizes = [16, 8], strides = [1, 1]} : vector<16x96xf32> to vector<16x8xf32>
    %91 = vector.extract_strided_slice %34 {offsets = [0, 56], sizes = [16, 8], strides = [1, 1]} : vector<16x96xf32> to vector<16x8xf32>
    %92 = vector.extract_strided_slice %34 {offsets = [0, 88], sizes = [16, 8], strides = [1, 1]} : vector<16x96xf32> to vector<16x8xf32>
    %cst_36 = arith.constant dense<0.000000e+00> : vector<16x16xf32>
    %93 = tpu.matmul %90, %91, %cst_36 {dimension_numbers = #tpu.dot_dimension_numbers<[1], [1], [0], [0], [0, 0, 1, 0], [], []>} : vector<16x8xf32>, vector<16x8xf32>, vector<16x16xf32> -> vector<16x16xf32>
    %cst_37 = arith.constant 0.353553385 : f32
    %94 = vector.broadcast %cst_37 : f32 to vector<16x16xf32>
    %95 = arith.mulf %93, %94 : vector<16x16xf32>
    %96 = arith.addf %95, %35 : vector<16x16xf32>
    %cst_38 = arith.constant dense<0xFF800000> : vector<16xf32>
    %97 = vector.multi_reduction <maximumf>, %96, %cst_38 [1] : vector<16x16xf32> to vector<16xf32>
    %98 = vector.shape_cast %97 : vector<16xf32> to vector<16x1xf32>
    %99 = vector.broadcast %98 : vector<16x1xf32> to vector<16x16xf32>
    %100 = arith.subf %96, %99 : vector<16x16xf32>
    %101 = math.exp %100 : vector<16x16xf32>
    %cst_39 = arith.constant dense<0.000000e+00> : vector<16xf32>
    %102 = vector.multi_reduction <add>, %101, %cst_39 [1] : vector<16x16xf32> to vector<16xf32>
    %103 = vector.shape_cast %102 : vector<16xf32> to vector<16x1xf32>
    %104 = tpu.reciprocal %103 {approx = true} : vector<16x1xf32> -> vector<16x1xf32>
    %105 = vector.broadcast %104 : vector<16x1xf32> to vector<16x16xf32>
    %106 = arith.mulf %101, %105 : vector<16x16xf32>
    %cst_40 = arith.constant dense<0.000000e+00> : vector<16x8xf32>
    %107 = tpu.matmul %106, %92, %cst_40 {dimension_numbers = #tpu.dot_dimension_numbers<[1], [0], [0], [1], [0, 0, 1, 1], [], []>} : vector<16x16xf32>, vector<16x8xf32>, vector<16x8xf32> -> vector<16x8xf32>
    %108 = tpu.concatenate %53, %71, %89, %107 in 1 : vector<16x8xf32>, vector<16x8xf32>, vector<16x8xf32>, vector<16x8xf32> -> vector<16x32xf32>
    %c0_41 = arith.constant 0 : index
    %c0_42 = arith.constant 0 : index
    %c0_43 = arith.constant 0 : index
    %109 = vector.load %arg10[%c0_41, %c0_42, %c0_43] : memref<1x32x32xf32, #tpu.memory_space<vmem>>, vector<1x32x32xf32>
    %110 = vector.shape_cast %109 : vector<1x32x32xf32> to vector<32x32xf32>
    %cst_44 = arith.constant dense<0.000000e+00> : vector<16x32xf32>
    %111 = tpu.matmul %108, %110, %cst_44 {dimension_numbers = #tpu.dot_dimension_numbers<[1], [0], [0], [1], [0, 0, 1, 1], [], []>} : vector<16x32xf32>, vector<32x32xf32>, vector<16x32xf32> -> vector<16x32xf32>
    %c0_45 = arith.constant 0 : index
    %c0_46 = arith.constant 0 : index
    %c0_47 = arith.constant 0 : index
    %112 = vector.load %arg11[%c0_45, %c0_46, %c0_47] : memref<1x1x32xf32, #tpu.memory_space<vmem>>, vector<1x1x32xf32>
    %113 = vector.shape_cast %112 : vector<1x1x32xf32> to vector<1x32xf32>
    %114 = vector.broadcast %113 : vector<1x32xf32> to vector<16x32xf32>
    %115 = arith.addf %111, %114 : vector<16x32xf32>
    %116 = arith.addf %3, %115 : vector<16x32xf32>
    %c0_48 = arith.constant 0 : index
    %c0_49 = arith.constant 0 : index
    %c0_50 = arith.constant 0 : index
    %117 = vector.load %arg12[%c0_48, %c0_49, %c0_50] : memref<1x1x32xf32, #tpu.memory_space<vmem>>, vector<1x1x32xf32>
    %118 = vector.shape_cast %117 : vector<1x1x32xf32> to vector<1x32xf32>
    %c0_51 = arith.constant 0 : index
    %c0_52 = arith.constant 0 : index
    %c0_53 = arith.constant 0 : index
    %119 = vector.load %arg13[%c0_51, %c0_52, %c0_53] : memref<1x1x32xf32, #tpu.memory_space<vmem>>, vector<1x1x32xf32>
    %120 = vector.shape_cast %119 : vector<1x1x32xf32> to vector<1x32xf32>
    %cst_54 = arith.constant dense<0.000000e+00> : vector<16xf32>
    %121 = vector.multi_reduction <add>, %116, %cst_54 [1] : vector<16x32xf32> to vector<16xf32>
    %122 = vector.shape_cast %121 : vector<16xf32> to vector<16x1xf32>
    %cst_55 = arith.constant 3.200000e+01 : f32
    %123 = vector.broadcast %cst_55 : f32 to vector<16x1xf32>
    %124 = arith.divf %122, %123 : vector<16x1xf32>
    %125 = vector.broadcast %124 : vector<16x1xf32> to vector<16x32xf32>
    %126 = arith.subf %116, %125 : vector<16x32xf32>
    %127 = arith.mulf %126, %126 : vector<16x32xf32>
    %cst_56 = arith.constant dense<0.000000e+00> : vector<16xf32>
    %128 = vector.multi_reduction <add>, %127, %cst_56 [1] : vector<16x32xf32> to vector<16xf32>
    %129 = vector.shape_cast %128 : vector<16xf32> to vector<16x1xf32>
    %cst_57 = arith.constant 3.200000e+01 : f32
    %130 = vector.broadcast %cst_57 : f32 to vector<16x1xf32>
    %131 = arith.divf %129, %130 : vector<16x1xf32>
    %cst_58 = arith.constant 9.99999974E-6 : f32
    %132 = vector.broadcast %cst_58 : f32 to vector<16x1xf32>
    %133 = arith.addf %131, %132 : vector<16x1xf32>
    %134 = math.rsqrt %133 : vector<16x1xf32>
    %135 = vector.broadcast %134 : vector<16x1xf32> to vector<16x32xf32>
    %136 = arith.mulf %126, %135 : vector<16x32xf32>
    %137 = vector.broadcast %118 : vector<1x32xf32> to vector<16x32xf32>
    %138 = arith.mulf %136, %137 : vector<16x32xf32>
    %139 = vector.broadcast %120 : vector<1x32xf32> to vector<16x32xf32>
    %140 = arith.addf %138, %139 : vector<16x32xf32>
    %c0_59 = arith.constant 0 : index
    %c0_60 = arith.constant 0 : index
    %c0_61 = arith.constant 0 : index
    %141 = vector.load %arg14[%c0_59, %c0_60, %c0_61] : memref<1x32x128xf32, #tpu.memory_space<vmem>>, vector<1x32x128xf32>
    %142 = vector.shape_cast %141 : vector<1x32x128xf32> to vector<32x128xf32>
    %cst_62 = arith.constant dense<0.000000e+00> : vector<16x128xf32>
    %143 = tpu.matmul %140, %142, %cst_62 {dimension_numbers = #tpu.dot_dimension_numbers<[1], [0], [0], [1], [0, 0, 1, 1], [], []>} : vector<16x32xf32>, vector<32x128xf32>, vector<16x128xf32> -> vector<16x128xf32>
    %c0_63 = arith.constant 0 : index
    %c0_64 = arith.constant 0 : index
    %c0_65 = arith.constant 0 : index
    %144 = vector.load %arg15[%c0_63, %c0_64, %c0_65] : memref<1x1x128xf32, #tpu.memory_space<vmem>>, vector<1x1x128xf32>
    %145 = vector.shape_cast %144 : vector<1x1x128xf32> to vector<1x128xf32>
    %146 = vector.broadcast %145 : vector<1x128xf32> to vector<16x128xf32>
    %147 = arith.addf %143, %146 : vector<16x128xf32>
    %cst_66 = arith.constant 5.000000e-01 : f32
    %148 = vector.broadcast %cst_66 : f32 to vector<16x128xf32>
    %149 = arith.mulf %148, %147 : vector<16x128xf32>
    %cst_67 = arith.constant 4.471500e-02 : f32
    %150 = vector.broadcast %cst_67 : f32 to vector<16x128xf32>
    %151 = arith.mulf %150, %147 : vector<16x128xf32>
    %152 = arith.mulf %151, %147 : vector<16x128xf32>
    %153 = arith.mulf %152, %147 : vector<16x128xf32>
    %154 = arith.addf %147, %153 : vector<16x128xf32>
    %cst_68 = arith.constant 0.797884583 : f32
    %155 = vector.broadcast %cst_68 : f32 to vector<16x128xf32>
    %156 = arith.mulf %155, %154 : vector<16x128xf32>
    %157 = math.tanh %156 : vector<16x128xf32>
    %cst_69 = arith.constant 1.000000e+00 : f32
    %158 = vector.broadcast %cst_69 : f32 to vector<16x128xf32>
    %159 = arith.addf %158, %157 : vector<16x128xf32>
    %160 = arith.mulf %149, %159 : vector<16x128xf32>
    %c0_70 = arith.constant 0 : index
    %c0_71 = arith.constant 0 : index
    %c0_72 = arith.constant 0 : index
    %161 = vector.load %arg16[%c0_70, %c0_71, %c0_72] : memref<1x128x32xf32, #tpu.memory_space<vmem>>, vector<1x128x32xf32>
    %162 = vector.shape_cast %161 : vector<1x128x32xf32> to vector<128x32xf32>
    %cst_73 = arith.constant dense<0.000000e+00> : vector<16x32xf32>
    %163 = tpu.matmul %160, %162, %cst_73 {dimension_numbers = #tpu.dot_dimension_numbers<[1], [0], [0], [1], [0, 0, 1, 1], [], []>} : vector<16x128xf32>, vector<128x32xf32>, vector<16x32xf32> -> vector<16x32xf32>
    %164 = arith.addf %116, %163 : vector<16x32xf32>
    %c0_74 = arith.constant 0 : index
    %c0_75 = arith.constant 0 : index
    %c0_76 = arith.constant 0 : index
    %165 = vector.load %arg17[%c0_74, %c0_75, %c0_76] : memref<1x1x32xf32, #tpu.memory_space<vmem>>, vector<1x1x32xf32>
    %166 = vector.shape_cast %165 : vector<1x1x32xf32> to vector<1x32xf32>
    %167 = vector.broadcast %166 : vector<1x32xf32> to vector<16x32xf32>
    %168 = arith.addf %164, %167 : vector<16x32xf32>
    %c0_77 = arith.constant 0 : index
    %c0_78 = arith.constant 0 : index
    %169 = vector.load %arg23[%c0_77, %c0_78] : memref<16x32xf32, #tpu.memory_space<vmem>>, vector<16x32xf32>
    tpu.vector_store %arg23[%c0_77, %c0_78], %168 {strides = array<i32>} : memref<16x32xf32, #tpu.memory_space<vmem>>, vector<16x32xf32>,
    %c1_i32 = arith.constant 1 : i32
    %170 = arith.cmpi eq, %arg0, %c1_i32 : i32
    %171 = arith.extui %170 : i1 to i32
    %c0_i32_79 = arith.constant 0 : i32
    %172 = arith.cmpi ne, %171, %c0_i32_79 : i32
    scf.if %172 {
      %c0_80 = arith.constant 0 : index
      %c0_81 = arith.constant 0 : index
      %173 = vector.load %arg18[%c0_80, %c0_81] : memref<1x32xf32, #tpu.memory_space<vmem>>, vector<1x32xf32>
      %c0_82 = arith.constant 0 : index
      %c0_83 = arith.constant 0 : index
      %174 = vector.load %arg19[%c0_82, %c0_83] : memref<1x32xf32, #tpu.memory_space<vmem>>, vector<1x32xf32>
      %cst_84 = arith.constant dense<0.000000e+00> : vector<16xf32>
      %175 = vector.multi_reduction <add>, %168, %cst_84 [1] : vector<16x32xf32> to vector<16xf32>
      %176 = vector.shape_cast %175 : vector<16xf32> to vector<16x1xf32>
      %cst_85 = arith.constant 3.200000e+01 : f32
      %177 = vector.broadcast %cst_85 : f32 to vector<16x1xf32>
      %178 = arith.divf %176, %177 : vector<16x1xf32>
      %179 = vector.broadcast %178 : vector<16x1xf32> to vector<16x32xf32>
      %180 = arith.subf %168, %179 : vector<16x32xf32>
      %181 = arith.mulf %180, %180 : vector<16x32xf32>
      %cst_86 = arith.constant dense<0.000000e+00> : vector<16xf32>
      %182 = vector.multi_reduction <add>, %181, %cst_86 [1] : vector<16x32xf32> to vector<16xf32>
      %183 = vector.shape_cast %182 : vector<16xf32> to vector<16x1xf32>
      %cst_87 = arith.constant 3.200000e+01 : f32
      %184 = vector.broadcast %cst_87 : f32 to vector<16x1xf32>
      %185 = arith.divf %183, %184 : vector<16x1xf32>
      %cst_88 = arith.constant 9.99999974E-6 : f32
      %186 = vector.broadcast %cst_88 : f32 to vector<16x1xf32>
      %187 = arith.addf %185, %186 : vector<16x1xf32>
      %188 = math.rsqrt %187 : vector<16x1xf32>
      %189 = vector.broadcast %188 : vector<16x1xf32> to vector<16x32xf32>
      %190 = arith.mulf %180, %189 : vector<16x32xf32>
      %191 = vector.broadcast %173 : vector<1x32xf32> to vector<16x32xf32>
      %192 = arith.mulf %190, %191 : vector<16x32xf32>
      %193 = vector.broadcast %174 : vector<1x32xf32> to vector<16x32xf32>
      %194 = arith.addf %192, %193 : vector<16x32xf32>
      %c0_89 = arith.constant 0 : index
      %c0_90 = arith.constant 0 : index
      %195 = vector.load %arg20[%c0_89, %c0_90] : memref<32x128xf32, #tpu.memory_space<vmem>>, vector<32x128xf32>
      %cst_91 = arith.constant dense<0.000000e+00> : vector<16x128xf32>
      %196 = tpu.matmul %194, %195, %cst_91 {dimension_numbers = #tpu.dot_dimension_numbers<[1], [0], [0], [1], [0, 0, 1, 1], [], []>} : vector<16x32xf32>, vector<32x128xf32>, vector<16x128xf32> -> vector<16x128xf32>
      %c0_92 = arith.constant 0 : index
      %c0_93 = arith.constant 0 : index
      %197 = vector.load %arg21[%c0_92, %c0_93] : memref<1x128xf32, #tpu.memory_space<vmem>>, vector<1x128xf32>
      %198 = vector.broadcast %197 : vector<1x128xf32> to vector<16x128xf32>
      %199 = arith.addf %196, %198 : vector<16x128xf32>
      %200 = math.tanh %199 : vector<16x128xf32>
      %c0_94 = arith.constant 0 : index
      %c0_95 = arith.constant 0 : index
      %201 = vector.load %arg22[%c0_94, %c0_95] : memref<16x128xf32, #tpu.memory_space<vmem>>, vector<16x128xf32>
      tpu.vector_store %arg22[%c0_94, %c0_95], %200 {strides = array<i32>} : memref<16x128xf32, #tpu.memory_space<vmem>>, vector<16x128xf32>,
    } else {
    }
    return
  }
  func.func @transform_0(%arg0: i32) -> (i32, i32) {
    %c0_i32 = arith.constant 0 : i32
    %c0_i32_0 = arith.constant 0 : i32
    %c0_i32_1 = arith.constant 0 : i32
    return %c0_i32, %c0_i32_0 : i32, i32
  }
  func.func @transform_1(%arg0: i32) -> (i32, i32) {
    %c0_i32 = arith.constant 0 : i32
    %c0_i32_0 = arith.constant 0 : i32
    %c0_i32_1 = arith.constant 0 : i32
    return %c0_i32, %c0_i32_0 : i32, i32
  }
  func.func @transform_2(%arg0: i32) -> (i32, i32) {
    %c0_i32 = arith.constant 0 : i32
    %c0_i32_0 = arith.constant 0 : i32
    %c0_i32_1 = arith.constant 0 : i32
    return %c0_i32, %c0_i32_0 : i32, i32
  }
  func.func @transform_3(%arg0: i32) -> (i32, i32) {
    %c0_i32 = arith.constant 0 : i32
    %c0_i32_0 = arith.constant 0 : i32
    %c0_i32_1 = arith.constant 0 : i32
    return %c0_i32, %c0_i32_0 : i32, i32
  }
  func.func @transform_4(%arg0: i32) -> (i32, i32) {
    %c0_i32 = arith.constant 0 : i32
    %c0_i32_0 = arith.constant 0 : i32
    %c0_i32_1 = arith.constant 0 : i32
    return %c0_i32, %c0_i32_0 : i32, i32
  }
  func.func @transform_5(%arg0: i32) -> (i32, i32, i32) {
    %c0_i32 = arith.constant 0 : i32
    %c0_i32_0 = arith.constant 0 : i32
    %c0_i32_1 = arith.constant 0 : i32
    return %arg0, %c0_i32, %c0_i32_0 : i32, i32, i32
  }
  func.func @transform_6(%arg0: i32) -> (i32, i32, i32) {
    %c0_i32 = arith.constant 0 : i32
    %c0_i32_0 = arith.constant 0 : i32
    %c0_i32_1 = arith.constant 0 : i32
    return %arg0, %c0_i32, %c0_i32_0 : i32, i32, i32
  }
  func.func @transform_7(%arg0: i32) -> (i32, i32, i32) {
    %c0_i32 = arith.constant 0 : i32
    %c0_i32_0 = arith.constant 0 : i32
    %c0_i32_1 = arith.constant 0 : i32
    return %arg0, %c0_i32, %c0_i32_0 : i32, i32, i32
  }
  func.func @transform_8(%arg0: i32) -> (i32, i32, i32) {
    %c0_i32 = arith.constant 0 : i32
    %c0_i32_0 = arith.constant 0 : i32
    %c0_i32_1 = arith.constant 0 : i32
    return %arg0, %c0_i32, %c0_i32_0 : i32, i32, i32
  }
  func.func @transform_9(%arg0: i32) -> (i32, i32, i32) {
    %c0_i32 = arith.constant 0 : i32
    %c0_i32_0 = arith.constant 0 : i32
    %c0_i32_1 = arith.constant 0 : i32
    return %arg0, %c0_i32, %c0_i32_0 : i32, i32, i32
  }
  func.func @transform_10(%arg0: i32) -> (i32, i32, i32) {
    %c0_i32 = arith.constant 0 : i32
    %c0_i32_0 = arith.constant 0 : i32
    %c0_i32_1 = arith.constant 0 : i32
    return %arg0, %c0_i32, %c0_i32_0 : i32, i32, i32
  }
  func.func @transform_11(%arg0: i32) -> (i32, i32, i32) {
    %c0_i32 = arith.constant 0 : i32
    %c0_i32_0 = arith.constant 0 : i32
    %c0_i32_1 = arith.constant 0 : i32
    return %arg0, %c0_i32, %c0_i32_0 : i32, i32, i32
  }
  func.func @transform_12(%arg0: i32) -> (i32, i32, i32) {
    %c0_i32 = arith.constant 0 : i32
    %c0_i32_0 = arith.constant 0 : i32
    %c0_i32_1 = arith.constant 0 : i32
    return %arg0, %c0_i32, %c0_i32_0 : i32, i32, i32
  }
  func.func @transform_13(%arg0: i32) -> (i32, i32, i32) {
    %c0_i32 = arith.constant 0 : i32
    %c0_i32_0 = arith.constant 0 : i32
    %c0_i32_1 = arith.constant 0 : i32
    return %arg0, %c0_i32, %c0_i32_0 : i32, i32, i32
  }
  func.func @transform_14(%arg0: i32) -> (i32, i32, i32) {
    %c0_i32 = arith.constant 0 : i32
    %c0_i32_0 = arith.constant 0 : i32
    %c0_i32_1 = arith.constant 0 : i32
    return %arg0, %c0_i32, %c0_i32_0 : i32, i32, i32
  }
  func.func @transform_15(%arg0: i32) -> (i32, i32, i32) {
    %c0_i32 = arith.constant 0 : i32
    %c0_i32_0 = arith.constant 0 : i32
    %c0_i32_1 = arith.constant 0 : i32
    return %arg0, %c0_i32, %c0_i32_0 : i32, i32, i32
  }
  func.func @transform_16(%arg0: i32) -> (i32, i32, i32) {
    %c0_i32 = arith.constant 0 : i32
    %c0_i32_0 = arith.constant 0 : i32
    %c0_i32_1 = arith.constant 0 : i32
    return %arg0, %c0_i32, %c0_i32_0 : i32, i32, i32
  }
  func.func @transform_17(%arg0: i32) -> (i32, i32) {
    %c0_i32 = arith.constant 0 : i32
    %c0_i32_0 = arith.constant 0 : i32
    %c0_i32_1 = arith.constant 0 : i32
    return %c0_i32, %c0_i32_0 : i32, i32
  }
  func.func @transform_18(%arg0: i32) -> (i32, i32) {
    %c0_i32 = arith.constant 0 : i32
    %c0_i32_0 = arith.constant 0 : i32
    %c0_i32_1 = arith.constant 0 : i32
    return %c0_i32, %c0_i32_0 : i32, i32
  }
  func.func @transform_19(%arg0: i32) -> (i32, i32) {
    %c0_i32 = arith.constant 0 : i32
    %c0_i32_0 = arith.constant 0 : i32
    %c0_i32_1 = arith.constant 0 : i32
    return %c0_i32, %c0_i32_0 : i32, i32
  }
  func.func @transform_20(%arg0: i32) -> (i32, i32) {
    %c0_i32 = arith.constant 0 : i32
    %c0_i32_0 = arith.constant 0 : i32
    %c0_i32_1 = arith.constant 0 : i32
    return %c0_i32, %c0_i32_0 : i32, i32
  }
  func.func @transform_21(%arg0: i32) -> (i32, i32) {
    %c0_i32 = arith.constant 0 : i32
    %c0_i32_0 = arith.constant 0 : i32
    %c0_i32_1 = arith.constant 0 : i32
    return %c0_i32, %c0_i32_0 : i32, i32
  }
}

</mosaic_0001>

<llo_original>
// kernel: tpu_custom_call.1
$region0: #{tpu_custom_call.1}
  #allocation0 [shape = 'u32[]', space=smem, size = 0x4, offset = 0x4, fixed_abs, tag = 'smem constant byte address 0x4 - core index']
  #allocation1 [shape = 'u32[72,128]{1,0:T(1,128)}', space=vmem, size = 0x9000, scoped, tag = 'internal scratch']
  #allocation2 [shape = 'f32[16,32]{1,0:T(8,128)}', space=vmem, size = 0x2000, scoped, tag = 'scratch operand']
  %s0 = inlined_call_operand.vmem [shape: f32[16,16], index: 0, kind: input, shape index: {}]
  %s1 = inlined_call_operand.vmem [shape: f32[16,32], index: 1, kind: input, shape index: {}]
  %s2 = inlined_call_operand.vmem [shape: f32[16,16], index: 2, kind: input, shape index: {}]
  %s3 = inlined_call_operand.vmem [shape: f32[16,32], index: 3, kind: input, shape index: {}]
  %s4 = inlined_call_operand.vmem [shape: f32[1,32], index: 4, kind: input, shape index: {}]
  %s5 = inlined_call_operand.vmem [shape: f32[2,1,32], index: 5, kind: input, shape index: {}]
  %s6 = inlined_call_operand.vmem [shape: f32[2,1,32], index: 6, kind: input, shape index: {}]
  %s7 = inlined_call_operand.vmem [shape: f32[2,32,96], index: 7, kind: input, shape index: {}]
  %s8 = inlined_call_operand.vmem [shape: f32[2,1,96], index: 8, kind: input, shape index: {}]
  %s9 = inlined_call_operand.vmem [shape: f32[2,32,32], index: 9, kind: input, shape index: {}]
  %s10 = inlined_call_operand.vmem [shape: f32[2,1,32], index: 10, kind: input, shape index: {}]
  %s11 = inlined_call_operand.vmem [shape: f32[2,1,32], index: 11, kind: input, shape index: {}]
  %s12 = inlined_call_operand.vmem [shape: f32[2,1,32], index: 12, kind: input, shape index: {}]
  %s13 = inlined_call_operand.vmem [shape: f32[2,32,128], index: 13, kind: input, shape index: {}]
  %s14 = inlined_call_operand.vmem [shape: f32[2,1,128], index: 14, kind: input, shape index: {}]
  %s15 = inlined_call_operand.vmem [shape: f32[2,128,32], index: 15, kind: input, shape index: {}]
  %s16 = inlined_call_operand.vmem [shape: f32[2,1,32], index: 16, kind: input, shape index: {}]
  %s17 = inlined_call_operand.vmem [shape: f32[1,32], index: 17, kind: input, shape index: {}]
  %s18 = inlined_call_operand.vmem [shape: f32[1,32], index: 18, kind: input, shape index: {}]
  %s19 = inlined_call_operand.vmem [shape: f32[32,128], index: 19, kind: input, shape index: {}]
  %s20 = inlined_call_operand.vmem [shape: f32[1,128], index: 20, kind: input, shape index: {}]
  %s21 = inlined_call_operand.hbm [shape: f32[16,128], index: 21, kind: output, shape index: {}]
  %s22 = sld [smem:[#allocation0]]
  $region125: #{tpu_custom_call.1} parent=0
    _
  %s24 = ssub.s32 1, %s22
  %s25 = scalar_select 0, %s24, %s22
  $region1: #{tpu_custom_call.1} parent=0
    #allocation3 [shape = 'u8[8192]{0}', space=vmem, size = 0x2000, scoped, tag = 'output window, operand 0, single buffered']
    #allocation4 [shape = 's32[2]{0}', space=sflag, size = 0x8, scoped, tag = 'scoped memory for tpu_custom_call.1']
    %26 = vsyncpa [#allocation4], 0
    loop: start=0, step=1, limit=4
    $region2: #{tpu_custom_call.1} parent=1 // loop_pre_header
      _
    $region3: #{tpu_custom_call.1} parent=1 // loop_header
      %s28 = sphi 0, %s32
      %p29 = scmp.ge.s32.totalorder %s28, 4
      %s36 = sphi 0, %s36
      %s38 = sphi 0, %s36
      %s39 = sphi 0, %s38
      %s53 = sphi 0, %s39
      %s57 = sphi 0, %s57
      %s59 = sphi 0, %s57
      %s60 = sphi 0, %s59
      %s74 = sphi 0, %s60
      %s78 = sphi 0, %s78
      %s80 = sphi 0, %s78
      %s81 = sphi 0, %s80
      %s95 = sphi 0, %s81
      %s99 = sphi 0, %s99
      %s101 = sphi 0, %s99
      %s102 = sphi 0, %s101
      %s116 = sphi 0, %s102
      %s120 = sphi 0, %s120
      %s122 = sphi 0, %s120
      %s123 = sphi 0, %s122
      %s137 = sphi 0, %s123
      %s143 = sphi 0, %s145
      %s146 = sphi 0, %s143
      %s147 = sphi 0, %s146
      %s163 = sphi 0, %s147
      %s169 = sphi 0, %s171
      %s172 = sphi 0, %s169
      %s173 = sphi 0, %s172
      %s189 = sphi 0, %s173
      %s195 = sphi 0, %s197
      %s198 = sphi 0, %s195
      %s199 = sphi 0, %s198
      %s215 = sphi 0, %s199
      %s221 = sphi 0, %s223
      %s224 = sphi 0, %s221
      %s225 = sphi 0, %s224
      %s241 = sphi 0, %s225
      %s247 = sphi 0, %s249
      %s250 = sphi 0, %s247
      %s251 = sphi 0, %s250
      %s267 = sphi 0, %s251
      %s273 = sphi 0, %s275
      %s276 = sphi 0, %s273
      %s277 = sphi 0, %s276
      %s293 = sphi 0, %s277
      %s299 = sphi 0, %s301
      %s302 = sphi 0, %s299
      %s303 = sphi 0, %s302
      %s319 = sphi 0, %s303
      %s325 = sphi 0, %s327
      %s328 = sphi 0, %s325
      %s329 = sphi 0, %s328
      %s345 = sphi 0, %s329
      %s351 = sphi 0, %s353
      %s354 = sphi 0, %s351
      %s355 = sphi 0, %s354
      %s371 = sphi 0, %s355
      %s377 = sphi 0, %s379
      %s380 = sphi 0, %s377
      %s381 = sphi 0, %s380
      %s397 = sphi 0, %s381
      %s403 = sphi 0, %s405
      %s406 = sphi 0, %s403
      %s407 = sphi 0, %s406
      %s423 = sphi 0, %s407
      %s429 = sphi 0, %s431
      %s432 = sphi 0, %s429
      %s433 = sphi 0, %s432
      %s449 = sphi 0, %s433
      %s453 = sphi 0, %s453
      %s455 = sphi 0, %s453
      %s456 = sphi 0, %s455
      %s470 = sphi 0, %s456
      %s474 = sphi 0, %s474
      %s476 = sphi 0, %s474
      %s477 = sphi 0, %s476
      %s491 = sphi 0, %s477
      %s495 = sphi 0, %s495
      %s497 = sphi 0, %s495
      %s498 = sphi 0, %s497
      %s512 = sphi 0, %s498
      %s516 = sphi 0, %s516
      %s518 = sphi 0, %s516
      %s519 = sphi 0, %s518
      %s533 = sphi 0, %s519
      %s537 = sphi 0, %s537
      %s539 = sphi 0, %s537
      %s540 = sphi 0, %s539
      %s554 = sphi 0, %s540
    $region4: #{tpu_custom_call.1} parent=1 // loop_header_branch
      %31 = sbr.rel (%p29) target = $region8
    $region5: #{tpu_custom_call.1} parent=1 // loop_body
      %s33 = ssub.s32 %s28, 1
      %s34 = ssub.s32 %s28, 2
      %s35 = sadd.s32 %s28, 1
      %s37 = sadd.s32 %s36, 1
      %p40 = scmp.eq.s32.totalorder %s28, 1
      %p41 = scmp.ne.s32.totalorder %s36, %s38
      %p42 = scmp.eq.s32.totalorder %s28, 0
      %p43 = por %p41, %p42
      %p44 = scmp.ne.s32.totalorder %s36, %s38
      %p45 = scmp.eq.s32.totalorder %s33, 1
      %p46 = por %p44, %p45
      %p47 = scmp.ne.s32.totalorder %s38, %s39
      %p48 = scmp.eq.s32.totalorder %s33, 0
      %p49 = por %p47, %p48
      %p50 = scmp.ne.s32.totalorder %s38, %s39
      %p51 = scmp.eq.s32.totalorder %s34, 1
      %p52 = por %p50, %p51
      %p54 = scmp.ne.s32.totalorder %s39, %s53
      %p55 = scmp.eq.s32.totalorder %s34, 0
      %p56 = por %p54, %p55
      %s58 = sadd.s32 %s57, 1
      %p61 = scmp.eq.s32.totalorder %s28, 1
      %p62 = scmp.ne.s32.totalorder %s57, %s59
      %p63 = scmp.eq.s32.totalorder %s28, 0
      %p64 = por %p62, %p63
      %p65 = scmp.ne.s32.totalorder %s57, %s59
      %p66 = scmp.eq.s32.totalorder %s33, 1
      %p67 = por %p65, %p66
      %p68 = scmp.ne.s32.totalorder %s59, %s60
      %p69 = scmp.eq.s32.totalorder %s33, 0
      %p70 = por %p68, %p69
      %p71 = scmp.ne.s32.totalorder %s59, %s60
      %p72 = scmp.eq.s32.totalorder %s34, 1
      %p73 = por %p71, %p72
      %p75 = scmp.ne.s32.totalorder %s60, %s74
      %p76 = scmp.eq.s32.totalorder %s34, 0
      %p77 = por %p75, %p76
      %s79 = sadd.s32 %s78, 1
      %p82 = scmp.eq.s32.totalorder %s28, 1
      %p83 = scmp.ne.s32.totalorder %s78, %s80
      %p84 = scmp.eq.s32.totalorder %s28, 0
      %p85 = por %p83, %p84
      %p86 = scmp.ne.s32.totalorder %s78, %s80
      %p87 = scmp.eq.s32.totalorder %s33, 1
      %p88 = por %p86, %p87
      %p89 = scmp.ne.s32.totalorder %s80, %s81
      %p90 = scmp.eq.s32.totalorder %s33, 0
      %p91 = por %p89, %p90
      %p92 = scmp.ne.s32.totalorder %s80, %s81
      %p93 = scmp.eq.s32.totalorder %s34, 1
      %p94 = por %p92, %p93
      %p96 = scmp.ne.s32.totalorder %s81, %s95
      %p97 = scmp.eq.s32.totalorder %s34, 0
      %p98 = por %p96, %p97
      %s100 = sadd.s32 %s99, 1
      %p103 = scmp.eq.s32.totalorder %s28, 1
      %p104 = scmp.ne.s32.totalorder %s99, %s101
      %p105 = scmp.eq.s32.totalorder %s28, 0
      %p106 = por %p104, %p105
      %p107 = scmp.ne.s32.totalorder %s99, %s101
      %p108 = scmp.eq.s32.totalorder %s33, 1
      %p109 = por %p107, %p108
      %p110 = scmp.ne.s32.totalorder %s101, %s102
      %p111 = scmp.eq.s32.totalorder %s33, 0
      %p112 = por %p110, %p111
      %p113 = scmp.ne.s32.totalorder %s101, %s102
      %p114 = scmp.eq.s32.totalorder %s34, 1
      %p115 = por %p113, %p114
      %p117 = scmp.ne.s32.totalorder %s102, %s116
      %p118 = scmp.eq.s32.totalorder %s34, 0
      %p119 = por %p117, %p118
      %s121 = sadd.s32 %s120, 1
      %p124 = scmp.eq.s32.totalorder %s28, 1
      %p125 = scmp.ne.s32.totalorder %s120, %s122
      %p126 = scmp.eq.s32.totalorder %s28, 0
      %p127 = por %p125, %p126
      %p128 = scmp.ne.s32.totalorder %s120, %s122
      %p129 = scmp.eq.s32.totalorder %s33, 1
      %p130 = por %p128, %p129
      %p131 = scmp.ne.s32.totalorder %s122, %s123
      %p132 = scmp.eq.s32.totalorder %s33, 0
      %p133 = por %p131, %p132
      %p134 = scmp.ne.s32.totalorder %s122, %s123
      %p135 = scmp.eq.s32.totalorder %s34, 1
      %p136 = por %p134, %p135
      %p138 = scmp.ne.s32.totalorder %s123, %s137
      %p139 = scmp.eq.s32.totalorder %s34, 0
      %p140 = por %p138, %p139
      %s141 = ssub.s32 %s28, %s35
      %p142 = scmp.eq.s32.totalorder %s141, 0
      %s144 = sadd.s32 %s143, 1
      %s145 = scalar_select %p142, %s143, %s144
      %p148 = pneg %p142
      %p149 = scmp.eq.s32.totalorder %s28, 1
      %p150 = por %p148, %p149
      %p151 = scmp.ne.s32.totalorder %s143, %s146
      %p152 = scmp.eq.s32.totalorder %s28, 0
      %p153 = por %p151, %p152
      %p154 = scmp.ne.s32.totalorder %s143, %s146
      %p155 = scmp.eq.s32.totalorder %s33, 1
      %p156 = por %p154, %p155
      %p157 = scmp.ne.s32.totalorder %s146, %s147
      %p158 = scmp.eq.s32.totalorder %s33, 0
      %p159 = por %p157, %p158
      %p160 = scmp.ne.s32.totalorder %s146, %s147
      %p161 = scmp.eq.s32.totalorder %s34, 1
      %p162 = por %p160, %p161
      %p164 = scmp.ne.s32.totalorder %s147, %s163
      %p165 = scmp.eq.s32.totalorder %s34, 0
      %p166 = por %p164, %p165
      %s167 = ssub.s32 %s28, %s35
      %p168 = scmp.eq.s32.totalorder %s167, 0
      %s170 = sadd.s32 %s169, 1
      %s171 = scalar_select %p168, %s169, %s170
      %p174 = pneg %p168
      %p175 = scmp.eq.s32.totalorder %s28, 1
      %p176 = por %p174, %p175
      %p177 = scmp.ne.s32.totalorder %s169, %s172
      %p178 = scmp.eq.s32.totalorder %s28, 0
      %p179 = por %p177, %p178
      %p180 = scmp.ne.s32.totalorder %s169, %s172
      %p181 = scmp.eq.s32.totalorder %s33, 1
      %p182 = por %p180, %p181
      %p183 = scmp.ne.s32.totalorder %s172, %s173
      %p184 = scmp.eq.s32.totalorder %s33, 0
      %p185 = por %p183, %p184
      %p186 = scmp.ne.s32.totalorder %s172, %s173
      %p187 = scmp.eq.s32.totalorder %s34, 1
      %p188 = por %p186, %p187
      %p190 = scmp.ne.s32.totalorder %s173, %s189
      %p191 = scmp.eq.s32.totalorder %s34, 0
      %p192 = por %p190, %p191
      %s193 = ssub.s32 %s28, %s35
      %p194 = scmp.eq.s32.totalorder %s193, 0
      %s196 = sadd.s32 %s195, 1
      %s197 = scalar_select %p194, %s195, %s196
      %p200 = pneg %p194
      %p201 = scmp.eq.s32.totalorder %s28, 1
      %p202 = por %p200, %p201
      %p203 = scmp.ne.s32.totalorder %s195, %s198
      %p204 = scmp.eq.s32.totalorder %s28, 0
      %p205 = por %p203, %p204
      %p206 = scmp.ne.s32.totalorder %s195, %s198
      %p207 = scmp.eq.s32.totalorder %s33, 1
      %p208 = por %p206, %p207
      %p209 = scmp.ne.s32.totalorder %s198, %s199
      %p210 = scmp.eq.s32.totalorder %s33, 0
      %p211 = por %p209, %p210
      %p212 = scmp.ne.s32.totalorder %s198, %s199
      %p213 = scmp.eq.s32.totalorder %s34, 1
      %p214 = por %p212, %p213
      %p216 = scmp.ne.s32.totalorder %s199, %s215
      %p217 = scmp.eq.s32.totalorder %s34, 0
      %p218 = por %p216, %p217
      %s219 = ssub.s32 %s28, %s35
      %p220 = scmp.eq.s32.totalorder %s219, 0
      %s222 = sadd.s32 %s221, 1
      %s223 = scalar_select %p220, %s221, %s222
      %p226 = pneg %p220
      %p227 = scmp.eq.s32.totalorder %s28, 1
      %p228 = por %p226, %p227
      %p229 = scmp.ne.s32.totalorder %s221, %s224
      %p230 = scmp.eq.s32.totalorder %s28, 0
      %p231 = por %p229, %p230
      %p232 = scmp.ne.s32.totalorder %s221, %s224
      %p233 = scmp.eq.s32.totalorder %s33, 1
      %p234 = por %p232, %p233
      %p235 = scmp.ne.s32.totalorder %s224, %s225
      %p236 = scmp.eq.s32.totalorder %s33, 0
      %p237 = por %p235, %p236
      %p238 = scmp.ne.s32.totalorder %s224, %s225
      %p239 = scmp.eq.s32.totalorder %s34, 1
      %p240 = por %p238, %p239
      %p242 = scmp.ne.s32.totalorder %s225, %s241
      %p243 = scmp.eq.s32.totalorder %s34, 0
      %p244 = por %p242, %p243
      %s245 = ssub.s32 %s28, %s35
      %p246 = scmp.eq.s32.totalorder %s245, 0
      %s248 = sadd.s32 %s247, 1
      %s249 = scalar_select %p246, %s247, %s248
      %p252 = pneg %p246
      %p253 = scmp.eq.s32.totalorder %s28, 1
      %p254 = por %p252, %p253
      %p255 = scmp.ne.s32.totalorder %s247, %s250
      %p256 = scmp.eq.s32.totalorder %s28, 0
      %p257 = por %p255, %p256
      %p258 = scmp.ne.s32.totalorder %s247, %s250
      %p259 = scmp.eq.s32.totalorder %s33, 1
      %p260 = por %p258, %p259
      %p261 = scmp.ne.s32.totalorder %s250, %s251
      %p262 = scmp.eq.s32.totalorder %s33, 0
      %p263 = por %p261, %p262
      %p264 = scmp.ne.s32.totalorder %s250, %s251
      %p265 = scmp.eq.s32.totalorder %s34, 1
      %p266 = por %p264, %p265
      %p268 = scmp.ne.s32.totalorder %s251, %s267
      %p269 = scmp.eq.s32.totalorder %s34, 0
      %p270 = por %p268, %p269
      %s271 = ssub.s32 %s28, %s35
      %p272 = scmp.eq.s32.totalorder %s271, 0
      %s274 = sadd.s32 %s273, 1
      %s275 = scalar_select %p272, %s273, %s274
      %p278 = pneg %p272
      %p279 = scmp.eq.s32.totalorder %s28, 1
      %p280 = por %p278, %p279
      %p281 = scmp.ne.s32.totalorder %s273, %s276
      %p282 = scmp.eq.s32.totalorder %s28, 0
      %p283 = por %p281, %p282
      %p284 = scmp.ne.s32.totalorder %s273, %s276
      %p285 = scmp.eq.s32.totalorder %s33, 1
      %p286 = por %p284, %p285
      %p287 = scmp.ne.s32.totalorder %s276, %s277
      %p288 = scmp.eq.s32.totalorder %s33, 0
      %p289 = por %p287, %p288
      %p290 = scmp.ne.s32.totalorder %s276, %s277
      %p291 = scmp.eq.s32.totalorder %s34, 1
      %p292 = por %p290, %p291
      %p294 = scmp.ne.s32.totalorder %s277, %s293
      %p295 = scmp.eq.s32.totalorder %s34, 0
      %p296 = por %p294, %p295
      %s297 = ssub.s32 %s28, %s35
      %p298 = scmp.eq.s32.totalorder %s297, 0
      %s300 = sadd.s32 %s299, 1
      %s301 = scalar_select %p298, %s299, %s300
      %p304 = pneg %p298
      %p305 = scmp.eq.s32.totalorder %s28, 1
      %p306 = por %p304, %p305
      %p307 = scmp.ne.s32.totalorder %s299, %s302
      %p308 = scmp.eq.s32.totalorder %s28, 0
      %p309 = por %p307, %p308
      %p310 = scmp.ne.s32.totalorder %s299, %s302
      %p311 = scmp.eq.s32.totalorder %s33, 1
      %p312 = por %p310, %p311
      %p313 = scmp.ne.s32.totalorder %s302, %s303
      %p314 = scmp.eq.s32.totalorder %s33, 0
      %p315 = por %p313, %p314
      %p316 = scmp.ne.s32.totalorder %s302, %s303
      %p317 = scmp.eq.s32.totalorder %s34, 1
      %p318 = por %p316, %p317
      %p320 = scmp.ne.s32.totalorder %s303, %s319
      %p321 = scmp.eq.s32.totalorder %s34, 0
      %p322 = por %p320, %p321
      %s323 = ssub.s32 %s28, %s35
      %p324 = scmp.eq.s32.totalorder %s323, 0
      %s326 = sadd.s32 %s325, 1
      %s327 = scalar_select %p324, %s325, %s326
      %p330 = pneg %p324
      %p331 = scmp.eq.s32.totalorder %s28, 1
      %p332 = por %p330, %p331
      %p333 = scmp.ne.s32.totalorder %s325, %s328
      %p334 = scmp.eq.s32.totalorder %s28, 0
      %p335 = por %p333, %p334
      %p336 = scmp.ne.s32.totalorder %s325, %s328
      %p337 = scmp.eq.s32.totalorder %s33, 1
      %p338 = por %p336, %p337
      %p339 = scmp.ne.s32.totalorder %s328, %s329
      %p340 = scmp.eq.s32.totalorder %s33, 0
      %p341 = por %p339, %p340
      %p342 = scmp.ne.s32.totalorder %s328, %s329
      %p343 = scmp.eq.s32.totalorder %s34, 1
      %p344 = por %p342, %p343
      %p346 = scmp.ne.s32.totalorder %s329, %s345
      %p347 = scmp.eq.s32.totalorder %s34, 0
      %p348 = por %p346, %p347
      %s349 = ssub.s32 %s28, %s35
      %p350 = scmp.eq.s32.totalorder %s349, 0
      %s352 = sadd.s32 %s351, 1
      %s353 = scalar_select %p350, %s351, %s352
      %p356 = pneg %p350
      %p357 = scmp.eq.s32.totalorder %s28, 1
      %p358 = por %p356, %p357
      %p359 = scmp.ne.s32.totalorder %s351, %s354
      %p360 = scmp.eq.s32.totalorder %s28, 0
      %p361 = por %p359, %p360
      %p362 = scmp.ne.s32.totalorder %s351, %s354
      %p363 = scmp.eq.s32.totalorder %s33, 1
      %p364 = por %p362, %p363
      %p365 = scmp.ne.s32.totalorder %s354, %s355
      %p366 = scmp.eq.s32.totalorder %s33, 0
      %p367 = por %p365, %p366
      %p368 = scmp.ne.s32.totalorder %s354, %s355
      %p369 = scmp.eq.s32.totalorder %s34, 1
      %p370 = por %p368, %p369
      %p372 = scmp.ne.s32.totalorder %s355, %s371
      %p373 = scmp.eq.s32.totalorder %s34, 0
      %p374 = por %p372, %p373
      %s375 = ssub.s32 %s28, %s35
      %p376 = scmp.eq.s32.totalorder %s375, 0
      %s378 = sadd.s32 %s377, 1
      %s379 = scalar_select %p376, %s377, %s378
      %p382 = pneg %p376
      %p383 = scmp.eq.s32.totalorder %s28, 1
      %p384 = por %p382, %p383
      %p385 = scmp.ne.s32.totalorder %s377, %s380
      %p386 = scmp.eq.s32.totalorder %s28, 0
      %p387 = por %p385, %p386
      %p388 = scmp.ne.s32.totalorder %s377, %s380
      %p389 = scmp.eq.s32.totalorder %s33, 1
      %p390 = por %p388, %p389
      %p391 = scmp.ne.s32.totalorder %s380, %s381
      %p392 = scmp.eq.s32.totalorder %s33, 0
      %p393 = por %p391, %p392
      %p394 = scmp.ne.s32.totalorder %s380, %s381
      %p395 = scmp.eq.s32.totalorder %s34, 1
      %p396 = por %p394, %p395
      %p398 = scmp.ne.s32.totalorder %s381, %s397
      %p399 = scmp.eq.s32.totalorder %s34, 0
      %p400 = por %p398, %p399
      %s401 = ssub.s32 %s28, %s35
      %p402 = scmp.eq.s32.totalorder %s401, 0
      %s404 = sadd.s32 %s403, 1
      %s405 = scalar_select %p402, %s403, %s404
      %p408 = pneg %p402
      %p409 = scmp.eq.s32.totalorder %s28, 1
      %p410 = por %p408, %p409
      %p411 = scmp.ne.s32.totalorder %s403, %s406
      %p412 = scmp.eq.s32.totalorder %s28, 0
      %p413 = por %p411, %p412
      %p414 = scmp.ne.s32.totalorder %s403, %s406
      %p415 = scmp.eq.s32.totalorder %s33, 1
      %p416 = por %p414, %p415
      %p417 = scmp.ne.s32.totalorder %s406, %s407
      %p418 = scmp.eq.s32.totalorder %s33, 0
      %p419 = por %p417, %p418
      %p420 = scmp.ne.s32.totalorder %s406, %s407
      %p421 = scmp.eq.s32.totalorder %s34, 1
      %p422 = por %p420, %p421
      %p424 = scmp.ne.s32.totalorder %s407, %s423
      %p425 = scmp.eq.s32.totalorder %s34, 0
      %p426 = por %p424, %p425
      %s427 = ssub.s32 %s28, %s35
      %p428 = scmp.eq.s32.totalorder %s427, 0
      %s430 = sadd.s32 %s429, 1
      %s431 = scalar_select %p428, %s429, %s430
      %p434 = pneg %p428
      %p435 = scmp.eq.s32.totalorder %s28, 1
      %p436 = por %p434, %p435
      %p437 = scmp.ne.s32.totalorder %s429, %s432
      %p438 = scmp.eq.s32.totalorder %s28, 0
      %p439 = por %p437, %p438
      %p440 = scmp.ne.s32.totalorder %s429, %s432
      %p441 = scmp.eq.s32.totalorder %s33, 1
      %p442 = por %p440, %p441
      %p443 = scmp.ne.s32.totalorder %s432, %s433
      %p444 = scmp.eq.s32.totalorder %s33, 0
      %p445 = por %p443, %p444
      %p446 = scmp.ne.s32.totalorder %s432, %s433
      %p447 = scmp.eq.s32.totalorder %s34, 1
      %p448 = por %p446, %p447
      %p450 = scmp.ne.s32.totalorder %s433, %s449
      %p451 = scmp.eq.s32.totalorder %s34, 0
      %p452 = por %p450, %p451
      %s454 = sadd.s32 %s453, 1
      %p457 = scmp.eq.s32.totalorder %s28, 1
      %p458 = scmp.ne.s32.totalorder %s453, %s455
      %p459 = scmp.eq.s32.totalorder %s28, 0
      %p460 = por %p458, %p459
      %p461 = scmp.ne.s32.totalorder %s453, %s455
      %p462 = scmp.eq.s32.totalorder %s33, 1
      %p463 = por %p461, %p462
      %p464 = scmp.ne.s32.totalorder %s455, %s456
      %p465 = scmp.eq.s32.totalorder %s33, 0
      %p466 = por %p464, %p465
      %p467 = scmp.ne.s32.totalorder %s455, %s456
      %p468 = scmp.eq.s32.totalorder %s34, 1
      %p469 = por %p467, %p468
      %p471 = scmp.ne.s32.totalorder %s456, %s470
      %p472 = scmp.eq.s32.totalorder %s34, 0
      %p473 = por %p471, %p472
      %s475 = sadd.s32 %s474, 1
      %p478 = scmp.eq.s32.totalorder %s28, 1
      %p479 = scmp.ne.s32.totalorder %s474, %s476
      %p480 = scmp.eq.s32.totalorder %s28, 0
      %p481 = por %p479, %p480
      %p482 = scmp.ne.s32.totalorder %s474, %s476
      %p483 = scmp.eq.s32.totalorder %s33, 1
      %p484 = por %p482, %p483
      %p485 = scmp.ne.s32.totalorder %s476, %s477
      %p486 = scmp.eq.s32.totalorder %s33, 0
      %p487 = por %p485, %p486
      %p488 = scmp.ne.s32.totalorder %s476, %s477
      %p489 = scmp.eq.s32.totalorder %s34, 1
      %p490 = por %p488, %p489
      %p492 = scmp.ne.s32.totalorder %s477, %s491
      %p493 = scmp.eq.s32.totalorder %s34, 0
      %p494 = por %p492, %p493
      %s496 = sadd.s32 %s495, 1
      %p499 = scmp.eq.s32.totalorder %s28, 1
      %p500 = scmp.ne.s32.totalorder %s495, %s497
      %p501 = scmp.eq.s32.totalorder %s28, 0
      %p502 = por %p500, %p501
      %p503 = scmp.ne.s32.totalorder %s495, %s497
      %p504 = scmp.eq.s32.totalorder %s33, 1
      %p505 = por %p503, %p504
      %p506 = scmp.ne.s32.totalorder %s497, %s498
      %p507 = scmp.eq.s32.totalorder %s33, 0
      %p508 = por %p506, %p507
      %p509 = scmp.ne.s32.totalorder %s497, %s498
      %p510 = scmp.eq.s32.totalorder %s34, 1
      %p511 = por %p509, %p510
      %p513 = scmp.ne.s32.totalorder %s498, %s512
      %p514 = scmp.eq.s32.totalorder %s34, 0
      %p515 = por %p513, %p514
      %s517 = sadd.s32 %s516, 1
      %p520 = scmp.eq.s32.totalorder %s28, 1
      %p521 = scmp.ne.s32.totalorder %s516, %s518
      %p522 = scmp.eq.s32.totalorder %s28, 0
      %p523 = por %p521, %p522
      %p524 = scmp.ne.s32.totalorder %s516, %s518
      %p525 = scmp.eq.s32.totalorder %s33, 1
      %p526 = por %p524, %p525
      %p527 = scmp.ne.s32.totalorder %s518, %s519
      %p528 = scmp.eq.s32.totalorder %s33, 0
      %p529 = por %p527, %p528
      %p530 = scmp.ne.s32.totalorder %s518, %s519
      %p531 = scmp.eq.s32.totalorder %s34, 1
      %p532 = por %p530, %p531
      %p534 = scmp.ne.s32.totalorder %s519, %s533
      %p535 = scmp.eq.s32.totalorder %s34, 0
      %p536 = por %p534, %p535
      %s538 = sadd.s32 %s537, 1
      %p541 = scmp.eq.s32.totalorder %s28, 1
      %p542 = scmp.ne.s32.totalorder %s537, %s539
      %p543 = scmp.eq.s32.totalorder %s28, 0
      %p544 = por %p542, %p543
      %p545 = scmp.ne.s32.totalorder %s537, %s539
      %p546 = scmp.eq.s32.totalorder %s33, 1
      %p547 = por %p545, %p546
      %p548 = scmp.ne.s32.totalorder %s539, %s540
      %p549 = scmp.eq.s32.totalorder %s33, 0
      %p550 = por %p548, %p549
      %p551 = scmp.ne.s32.totalorder %s539, %s540
      %p552 = scmp.eq.s32.totalorder %s34, 1
      %p553 = por %p551, %p552
      %p555 = scmp.ne.s32.totalorder %s540, %s554
      %p556 = scmp.eq.s32.totalorder %s34, 0
      %p557 = por %p555, %p556
      %p558 = scmp.le.s32.totalorder 1, %s28
      %p559 = scmp.lt.s32.totalorder %s28, 3
      %p560 = pnand %p558, %p559
      %p561 = pneg %p560
      // Predicated region
      $region9: #{tpu_custom_call.1} parent=5 // pred_check
        _
      $region10: #{tpu_custom_call.1} parent=5 // pred_check_branch
        %563 = sbr.rel (%p560) target = $region12
      $region11: #{tpu_custom_call.1} parent=5 // pred_region
        %s564 = ssub.s32 %s28, 1
        // Predicated region
        $region13: #{tpu_custom_call.1} parent=11 // pred_check
          %p565 = pneg %p49
        $region14: #{tpu_custom_call.1} parent=11 // pred_check_branch
          %567 = sbr.rel (%p565) target = $region16
        $region15: #{tpu_custom_call.1} parent=11 // pred_region
          _
        $region16: #{tpu_custom_call.1} parent=11 // pred_fallthru
          _
        // Predicated region
        $region17: #{tpu_custom_call.1} parent=11 // pred_check
          %p568 = pneg %p70
        $region18: #{tpu_custom_call.1} parent=11 // pred_check_branch
          %570 = sbr.rel (%p568) target = $region20
        $region19: #{tpu_custom_call.1} parent=11 // pred_region
          _
        $region20: #{tpu_custom_call.1} parent=11 // pred_fallthru
          _
        // Predicated region
        $region21: #{tpu_custom_call.1} parent=11 // pred_check
          %p571 = pneg %p91
        $region22: #{tpu_custom_call.1} parent=11 // pred_check_branch
          %573 = sbr.rel (%p571) target = $region24
        $region23: #{tpu_custom_call.1} parent=11 // pred_region
          _
        $region24: #{tpu_custom_call.1} parent=11 // pred_fallthru
          _
        // Predicated region
        $region25: #{tpu_custom_call.1} parent=11 // pred_check
          %p574 = pneg %p112
        $region26: #{tpu_custom_call.1} parent=11 // pred_check_branch
          %576 = sbr.rel (%p574) target = $region28
        $region27: #{tpu_custom_call.1} parent=11 // pred_region
          _
        $region28: #{tpu_custom_call.1} parent=11 // pred_fallthru
          _
        // Predicated region
        $region29: #{tpu_custom_call.1} parent=11 // pred_check
          %p577 = pneg %p133
        $region30: #{tpu_custom_call.1} parent=11 // pred_check_branch
          %579 = sbr.rel (%p577) target = $region32
        $region31: #{tpu_custom_call.1} parent=11 // pred_region
          _
        $region32: #{tpu_custom_call.1} parent=11 // pred_fallthru
          _
        // Predicated region
        $region33: #{tpu_custom_call.1} parent=11 // pred_check
          %p580 = pneg %p466
        $region34: #{tpu_custom_call.1} parent=11 // pred_check_branch
          %582 = sbr.rel (%p580) target = $region36
        $region35: #{tpu_custom_call.1} parent=11 // pred_region
          _
        $region36: #{tpu_custom_call.1} parent=11 // pred_fallthru
          _
        // Predicated region
        $region37: #{tpu_custom_call.1} parent=11 // pred_check
          %p583 = pneg %p487
        $region38: #{tpu_custom_call.1} parent=11 // pred_check_branch
          %585 = sbr.rel (%p583) target = $region40
        $region39: #{tpu_custom_call.1} parent=11 // pred_region
          _
        $region40: #{tpu_custom_call.1} parent=11 // pred_fallthru
          _
        // Predicated region
        $region41: #{tpu_custom_call.1} parent=11 // pred_check
          %p586 = pneg %p508
        $region42: #{tpu_custom_call.1} parent=11 // pred_check_branch
          %588 = sbr.rel (%p586) target = $region44
        $region43: #{tpu_custom_call.1} parent=11 // pred_region
          _
        $region44: #{tpu_custom_call.1} parent=11 // pred_fallthru
          _
        // Predicated region
        $region45: #{tpu_custom_call.1} parent=11 // pred_check
          %p589 = pneg %p529
        $region46: #{tpu_custom_call.1} parent=11 // pred_check_branch
          %591 = sbr.rel (%p589) target = $region48
        $region47: #{tpu_custom_call.1} parent=11 // pred_region
          _
        $region48: #{tpu_custom_call.1} parent=11 // pred_fallthru
          _
      $region12: #{tpu_custom_call.1} parent=5 // pred_fallthru
        _
      %p592 = scmp.lt.s32.totalorder %s28, 2
      // Predicated region
      $region49: #{tpu_custom_call.1} parent=5 // pred_check
        %p593 = pneg %p592
      $region50: #{tpu_custom_call.1} parent=5 // pred_check_branch
        %595 = sbr.rel (%p593) target = $region52
      $region51: #{tpu_custom_call.1} parent=5 // pred_region
        // Predicated region
        $region53: #{tpu_custom_call.1} parent=51 // pred_check
          %p596 = pneg %p153
        $region54: #{tpu_custom_call.1} parent=51 // pred_check_branch
          %598 = sbr.rel (%p596) target = $region56
        $region55: #{tpu_custom_call.1} parent=51 // pred_region
          %p599 = scmp.lt.s32.totalorder %s28, 1
          %s600 = scalar_select %p599, %s28, 1
          %s601 = scalar_lea.vmem %s5, %s600
        $region56: #{tpu_custom_call.1} parent=51 // pred_fallthru
          _
        // Predicated region
        $region57: #{tpu_custom_call.1} parent=51 // pred_check
          %p602 = pneg %p179
        $region58: #{tpu_custom_call.1} parent=51 // pred_check_branch
          %604 = sbr.rel (%p602) target = $region60
        $region59: #{tpu_custom_call.1} parent=51 // pred_region
          %p605 = scmp.lt.s32.totalorder %s28, 1
          %s606 = scalar_select %p605, %s28, 1
          %s607 = scalar_lea.vmem %s6, %s606
        $region60: #{tpu_custom_call.1} parent=51 // pred_fallthru
          _
        // Predicated region
        $region61: #{tpu_custom_call.1} parent=51 // pred_check
          %p608 = pneg %p205
        $region62: #{tpu_custom_call.1} parent=51 // pred_check_branch
          %610 = sbr.rel (%p608) target = $region64
        $region63: #{tpu_custom_call.1} parent=51 // pred_region
          %p611 = scmp.lt.s32.totalorder %s28, 1
          %s612 = scalar_select %p611, %s28, 1
          %s613 = smul.addr %s612, 4
          %s614 = smul.addr %s613, 8
          %s615 = scalar_lea.vmem %s7, %s614
        $region64: #{tpu_custom_call.1} parent=51 // pred_fallthru
          _
        // Predicated region
        $region65: #{tpu_custom_call.1} parent=51 // pred_check
          %p616 = pneg %p231
        $region66: #{tpu_custom_call.1} parent=51 // pred_check_branch
          %618 = sbr.rel (%p616) target = $region68
        $region67: #{tpu_custom_call.1} parent=51 // pred_region
          %p619 = scmp.lt.s32.totalorder %s28, 1
          %s620 = scalar_select %p619, %s28, 1
          %s621 = scalar_lea.vmem %s8, %s620
        $region68: #{tpu_custom_call.1} parent=51 // pred_fallthru
          _
        // Predicated region
        $region69: #{tpu_custom_call.1} parent=51 // pred_check
          %p622 = pneg %p257
        $region70: #{tpu_custom_call.1} parent=51 // pred_check_branch
          %624 = sbr.rel (%p622) target = $region72
        $region71: #{tpu_custom_call.1} parent=51 // pred_region
          %p625 = scmp.lt.s32.totalorder %s28, 1
          %s626 = scalar_select %p625, %s28, 1
          %s627 = smul.addr %s626, 4
          %s628 = smul.addr %s627, 8
          %s629 = scalar_lea.vmem %s9, %s628
        $region72: #{tpu_custom_call.1} parent=51 // pred_fallthru
          _
        // Predicated region
        $region73: #{tpu_custom_call.1} parent=51 // pred_check
          %p630 = pneg %p283
        $region74: #{tpu_custom_call.1} parent=51 // pred_check_branch
          %632 = sbr.rel (%p630) target = $region76
        $region75: #{tpu_custom_call.1} parent=51 // pred_region
          %p633 = scmp.lt.s32.totalorder %s28, 1
          %s634 = scalar_select %p633, %s28, 1
          %s635 = scalar_lea.vmem %s10, %s634
        $region76: #{tpu_custom_call.1} parent=51 // pred_fallthru
          _
        // Predicated region
        $region77: #{tpu_custom_call.1} parent=51 // pred_check
          %p636 = pneg %p309
        $region78: #{tpu_custom_call.1} parent=51 // pred_check_branch
          %638 = sbr.rel (%p636) target = $region80
        $region79: #{tpu_custom_call.1} parent=51 // pred_region
          %p639 = scmp.lt.s32.totalorder %s28, 1
          %s640 = scalar_select %p639, %s28, 1
          %s641 = scalar_lea.vmem %s11, %s640
        $region80: #{tpu_custom_call.1} parent=51 // pred_fallthru
          _
        // Predicated region
        $region81: #{tpu_custom_call.1} parent=51 // pred_check
          %p642 = pneg %p335
        $region82: #{tpu_custom_call.1} parent=51 // pred_check_branch
          %644 = sbr.rel (%p642) target = $region84
        $region83: #{tpu_custom_call.1} parent=51 // pred_region
          %p645 = scmp.lt.s32.totalorder %s28, 1
          %s646 = scalar_select %p645, %s28, 1
          %s647 = scalar_lea.vmem %s12, %s646
        $region84: #{tpu_custom_call.1} parent=51 // pred_fallthru
          _
        // Predicated region
        $region85: #{tpu_custom_call.1} parent=51 // pred_check
          %p648 = pneg %p361
        $region86: #{tpu_custom_call.1} parent=51 // pred_check_branch
          %650 = sbr.rel (%p648) target = $region88
        $region87: #{tpu_custom_call.1} parent=51 // pred_region
          %p651 = scmp.lt.s32.totalorder %s28, 1
          %s652 = scalar_select %p651, %s28, 1
          %s653 = smul.addr %s652, 4
          %s654 = smul.addr %s653, 8
          %s655 = scalar_lea.vmem %s13, %s654
        $region88: #{tpu_custom_call.1} parent=51 // pred_fallthru
          _
        // Predicated region
        $region89: #{tpu_custom_call.1} parent=51 // pred_check
          %p656 = pneg %p387
        $region90: #{tpu_custom_call.1} parent=51 // pred_check_branch
          %658 = sbr.rel (%p656) target = $region92
        $region91: #{tpu_custom_call.1} parent=51 // pred_region
          %p659 = scmp.lt.s32.totalorder %s28, 1
          %s660 = scalar_select %p659, %s28, 1
          %s661 = scalar_lea.vmem %s14, %s660
        $region92: #{tpu_custom_call.1} parent=51 // pred_fallthru
          _
        // Predicated region
        $region93: #{tpu_custom_call.1} parent=51 // pred_check
          %p662 = pneg %p413
        $region94: #{tpu_custom_call.1} parent=51 // pred_check_branch
          %664 = sbr.rel (%p662) target = $region96
        $region95: #{tpu_custom_call.1} parent=51 // pred_region
          %p665 = scmp.lt.s32.totalorder %s28, 1
          %s666 = scalar_select %p665, %s28, 1
          %s667 = smul.addr %s666, 16
          %s668 = smul.addr %s667, 8
          %s669 = scalar_lea.vmem %s15, %s668
        $region96: #{tpu_custom_call.1} parent=51 // pred_fallthru
          _
        // Predicated region
        $region97: #{tpu_custom_call.1} parent=51 // pred_check
          %p670 = pneg %p439
        $region98: #{tpu_custom_call.1} parent=51 // pred_check_branch
          %672 = sbr.rel (%p670) target = $region100
        $region99: #{tpu_custom_call.1} parent=51 // pred_region
          %p673 = scmp.lt.s32.totalorder %s28, 1
          %s674 = scalar_select %p673, %s28, 1
          %s675 = scalar_lea.vmem %s16, %s674
        $region100: #{tpu_custom_call.1} parent=51 // pred_fallthru
          _
      $region52: #{tpu_custom_call.1} parent=5 // pred_fallthru
        _
      %p676 = scmp.le.s32.totalorder 1, %s28
      %p677 = scmp.lt.s32.totalorder %s28, 3
      %p678 = pnand %p676, %p677
      %p679 = pneg %p678
      // Predicated region
      $region101: #{tpu_custom_call.1} parent=5 // pred_check
        _
      $region102: #{tpu_custom_call.1} parent=5 // pred_check_branch
        %681 = sbr.rel (%p678) target = $region104
      $region103: #{tpu_custom_call.1} parent=5 // pred_region
        %s682 = ssub.s32 %s28, 1
        %p683 = pneg %p49
        %p684 = pneg %p46
        %p685 = pneg %p70
        %p686 = pneg %p67
        %p687 = pneg %p91
        %p688 = pneg %p88
        %p689 = pneg %p112
        %p690 = pneg %p109
        %p691 = pneg %p133
        %p692 = pneg %p130
        %p693 = scmp.lt.s32.totalorder %s33, 1
        %s694 = scalar_select %p693, %s33, 1
        %s695 = scalar_lea.vmem %s5, %s694
        %p696 = pneg %p159
        %p697 = pneg %p156
        %p698 = scmp.lt.s32.totalorder %s33, 1
        %s699 = scalar_select %p698, %s33, 1
        %s700 = scalar_lea.vmem %s6, %s699
        %p701 = pneg %p185
        %p702 = pneg %p182
        %p703 = scmp.lt.s32.totalorder %s33, 1
        %s704 = scalar_select %p703, %s33, 1
        %s705 = smul.addr %s704, 4
        %s706 = smul.addr %s705, 8
        %s707 = scalar_lea.vmem %s7, %s706
        %p708 = pneg %p211
        %p709 = pneg %p208
        %p710 = scmp.lt.s32.totalorder %s33, 1
        %s711 = scalar_select %p710, %s33, 1
        %s712 = scalar_lea.vmem %s8, %s711
        %p713 = pneg %p237
        %p714 = pneg %p234
        %p715 = scmp.lt.s32.totalorder %s33, 1
        %s716 = scalar_select %p715, %s33, 1
        %s717 = smul.addr %s716, 4
        %s718 = smul.addr %s717, 8
        %s719 = scalar_lea.vmem %s9, %s718
        %p720 = pneg %p263
        %p721 = pneg %p260
        %p722 = scmp.lt.s32.totalorder %s33, 1
        %s723 = scalar_select %p722, %s33, 1
        %s724 = scalar_lea.vmem %s10, %s723
        %p725 = pneg %p289
        %p726 = pneg %p286
        %p727 = scmp.lt.s32.totalorder %s33, 1
        %s728 = scalar_select %p727, %s33, 1
        %s729 = scalar_lea.vmem %s11, %s728
        %p730 = pneg %p315
        %p731 = pneg %p312
        %p732 = scmp.lt.s32.totalorder %s33, 1
        %s733 = scalar_select %p732, %s33, 1
        %s734 = scalar_lea.vmem %s12, %s733
        %p735 = pneg %p341
        %p736 = pneg %p338
        %p737 = scmp.lt.s32.totalorder %s33, 1
        %s738 = scalar_select %p737, %s33, 1
        %s739 = smul.addr %s738, 4
        %s740 = smul.addr %s739, 8
        %s741 = scalar_lea.vmem %s13, %s740
        %p742 = pneg %p367
        %p743 = pneg %p364
        %p744 = scmp.lt.s32.totalorder %s33, 1
        %s745 = scalar_select %p744, %s33, 1
        %s746 = scalar_lea.vmem %s14, %s745
        %p747 = pneg %p393
        %p748 = pneg %p390
        %p749 = scmp.lt.s32.totalorder %s33, 1
        %s750 = scalar_select %p749, %s33, 1
        %s751 = smul.addr %s750, 16
        %s752 = smul.addr %s751, 8
        %s753 = scalar_lea.vmem %s15, %s752
        %p754 = pneg %p419
        %p755 = pneg %p416
        %p756 = scmp.lt.s32.totalorder %s33, 1
        %s757 = scalar_select %p756, %s33, 1
        %s758 = scalar_lea.vmem %s16, %s757
        %p759 = pneg %p445
        %p760 = pneg %p442
        %p761 = pneg %p466
        %p762 = pneg %p463
        %p763 = pneg %p487
        %p764 = pneg %p484
        %p765 = pneg %p508
        %p766 = pneg %p505
        %p767 = pneg %p529
        %p768 = pneg %p526
        %p769 = pneg %p550
        %p770 = pneg %p547
        %p771 = scmp.lt.s32.totalorder %s33, 1
        %s772 = scalar_select %p771, %s33, 1
        %s773 = scalar_lea.vmem %s5, %s772
        %p774 = scmp.lt.s32.totalorder %s33, 1
        %s775 = scalar_select %p774, %s33, 1
        %s776 = scalar_lea.vmem %s6, %s775
        %p777 = scmp.lt.s32.totalorder %s33, 1
        %s778 = scalar_select %p777, %s33, 1
        %s779 = smul.addr %s778, 4
        %s780 = smul.addr %s779, 8
        %s781 = scalar_lea.vmem %s7, %s780
        %p782 = scmp.lt.s32.totalorder %s33, 1
        %s783 = scalar_select %p782, %s33, 1
        %s784 = scalar_lea.vmem %s8, %s783
        %p785 = scmp.lt.s32.totalorder %s33, 1
        %s786 = scalar_select %p785, %s33, 1
        %s787 = smul.addr %s786, 4
        %s788 = smul.addr %s787, 8
        %s789 = scalar_lea.vmem %s9, %s788
        %p790 = scmp.lt.s32.totalorder %s33, 1
        %s791 = scalar_select %p790, %s33, 1
        %s792 = scalar_lea.vmem %s10, %s791
        %p793 = scmp.lt.s32.totalorder %s33, 1
        %s794 = scalar_select %p793, %s33, 1
        %s795 = scalar_lea.vmem %s11, %s794
        %p796 = scmp.lt.s32.totalorder %s33, 1
        %s797 = scalar_select %p796, %s33, 1
        %s798 = scalar_lea.vmem %s12, %s797
        %p799 = scmp.lt.s32.totalorder %s33, 1
        %s800 = scalar_select %p799, %s33, 1
        %s801 = smul.addr %s800, 4
        %s802 = smul.addr %s801, 8
        %s803 = scalar_lea.vmem %s13, %s802
        %p804 = scmp.lt.s32.totalorder %s33, 1
        %s805 = scalar_select %p804, %s33, 1
        %s806 = scalar_lea.vmem %s14, %s805
        %p807 = scmp.lt.s32.totalorder %s33, 1
        %s808 = scalar_select %p807, %s33, 1
        %s809 = smul.addr %s808, 16
        %s810 = smul.addr %s809, 8
        %s811 = scalar_lea.vmem %s15, %s810
        %p812 = scmp.lt.s32.totalorder %s33, 1
        %s813 = scalar_select %p812, %s33, 1
        %s814 = scalar_lea.vmem %s16, %s813
        %p815 = scmp.eq.s32.totalorder %s33, 0
        // Predicated region
        $region105: #{tpu_custom_call.1} parent=103 // pred_check
          %p816 = pneg %p815
        $region106: #{tpu_custom_call.1} parent=103 // pred_check_branch
          %818 = sbr.rel (%p816) target = $region108
        $region107: #{tpu_custom_call.1} parent=103 // pred_region
          %v819 = vld [vmem:[%s0] sm:$0xff]
          %v820 = vld [vmem:[%s0 + $0x8] sm:$0xff]
          %v821 = vld [vmem:[%s3] sm:$0xff]
          %v822 = vld [vmem:[%s3 + $0x8] sm:$0xff]
          %v823 = vld [vmem:[%s4] sm:$0x1]
          %v825 = vperm.slane %v823, 0
          %vm827 = vcmask 130048
          %v829 = vsel %vm827, %v819, 0
          %v832 = vsel %vm827, %v820, 0
          %834 = vmatpush.msra.mxu0 0.0
          %835 = vmatpush.msra.mxu0 0.0
          %836 = vmatpush.msra.mxu0 0.0
          %837 = vmatpush.msra.mxu0 0.0
          %838 = vmatpush.msra.mxu0 0.0
          %839 = vmatpush.msra.mxu0 0.0
          %840 = vmatpush.msra.mxu0 0.0
          %841 = vmatpush.msra.mxu0 0.0
          %842 = vmatpush.msra.mxu0 0.0
          %843 = vmatpush.msra.mxu0 0.0
          %844 = vmatpush.msra.mxu0 0.0
          %845 = vmatpush.msra.mxu0 0.0
          %846 = vmatpush.msra.mxu0 0.0
          %847 = vmatpush.msra.mxu0 0.0
          %848 = vmatpush.msra.mxu0 %v822
          %849 = vmatpush.msra.mxu0 %v821
          %850 = vmatmul.f32.gmra.mxu0 %v829
          %v851 = vpop.f32.mrf.mxu0
          %v852 = vadd.f32 %v825, %v851
          %853 = vmatmul.f32.gmra.mxu0 %v832
          %v854 = vpop.f32.mrf.mxu0
          %v855 = vadd.f32 %v825, %v854
          %856 = vdwg.mxu0
          %v857 = vtanh.pop %v852
          %v858 = vtanh.pop %v855
          %v859 = vld [vmem:[%s1] sm:$0xff]
          %v860 = vld [vmem:[%s1 + $0x8] sm:$0xff]
          %v861 = vadd.f32 %v857, %v859
          %v862 = vadd.f32 %v858, %v860
          %vm863 = vcmask 261120
          %864 = vst.msk [vmem:[#allocation2] sm:$0xff] %vm863, %v861
          %865 = vst.msk [vmem:[#allocation2 + $0x8] sm:$0xff] %vm863, %v862
        $region108: #{tpu_custom_call.1} parent=103 // pred_fallthru
          _
        %v866 = vld [vmem:[#allocation2] sm:$0xff]
        %v867 = vld [vmem:[#allocation2 + $0x8] sm:$0xff]
        %v868 = vld [vmem:[%s773] sm:$0x1]
        %v869 = vld [vmem:[%s776] sm:$0x1]
        %vm870 = vcmask 261120
        %v871 = vsel %vm870, %v866, 0.0
        %872 = vadd.xlane.f32.xlu0 %v871
        %v873 = vpop.xlane.xlu0 %872
        %v874 = vsel %vm870, %v867, 0.0
        %875 = vadd.xlane.f32.xlu0 %v874
        %v876 = vpop.xlane.xlu0 %875
        %v877 = vrcp.pop 32.0
        %v878 = vmul.f32 32.0, %v877
        %v879 = vsub.f32 1.0, %v878
        %v880 = vmul.f32 %v877, %v879
        %v881 = vadd.f32 %v877, %v880
        %vm882 = vweird.f32 %v877
        %v883 = vsel %vm882, %v877, %v881
        %v884 = vmul.f32 %v873, %v883
        %v885 = vmul.f32 %v876, %v883
        %v886 = vsub.f32 %v866, %v884
        %v887 = vsub.f32 %v867, %v885
        %v888 = vmul.f32 %v886, %v886
        %v889 = vmul.f32 %v887, %v887
        %v890 = vsel %vm870, %v888, 0.0
        %891 = vadd.xlane.f32.xlu0 %v890
        %v892 = vpop.xlane.xlu0 %891
        %v893 = vsel %vm870, %v889, 0.0
        %894 = vadd.xlane.f32.xlu0 %v893
        %v895 = vpop.xlane.xlu0 %894
        %v896 = vmul.f32 %v892, %v883
        %v897 = vmul.f32 %v895, %v883
        %v898 = vadd.f32 %v896, 1e-05
        %v899 = vadd.f32 %v897, 1e-05
        %v900 = vrsqrt.pop %v898
        %v901 = vmul.f32 %v900, %v898
        %v902 = vmul.f32 %v901, %v900
        %v903 = vmul.f32 0.5, %v902
        %v904 = vsub.f32 1.5, %v903
        %v905 = vmul.f32 %v900, %v904
        %vm906 = vweird.f32 %v898
        %vm907 = vweird.f32 %v900
        %vm908 = vmor %vm906, %vm907
        %v909 = vsel %vm908, %v900, %v905
        %v910 = vrsqrt.pop %v899
        %v911 = vmul.f32 %v910, %v899
        %v912 = vmul.f32 %v911, %v910
        %v913 = vmul.f32 0.5, %v912
        %v914 = vsub.f32 1.5, %v913
        %v915 = vmul.f32 %v910, %v914
        %vm916 = vweird.f32 %v899
        %vm917 = vweird.f32 %v910
        %vm918 = vmor %vm916, %vm917
        %v919 = vsel %vm918, %v910, %v915
        %v920 = vmul.f32 %v886, %v909
        %v921 = vmul.f32 %v887, %v919
        %v923 = vperm.slane %v868, 0
        %v925 = vmul.f32 %v920, %v923
        %v926 = vmul.f32 %v921, %v923
        %v928 = vperm.slane %v869, 0
        %v930 = vadd.f32 %v925, %v928
        %v931 = vadd.f32 %v926, %v928
        %v932 = vld [vmem:[%s781] sm:$0xff]
        %v933 = vld [vmem:[%s781 + $0x8] sm:$0xff]
        %v934 = vld [vmem:[%s781 + $0x10] sm:$0xff]
        %v935 = vld [vmem:[%s781 + $0x18] sm:$0xff]
        %v936 = vld [vmem:[%s784] sm:$0x1]
        %v938 = vperm.slane %v936, 0
        %v941 = vsel %vm870, %v930, 0
        %v944 = vsel %vm870, %v931, 0
        %946 = vmatpush.msra.mxu0 0.0
        %947 = vmatpush.msra.mxu0 0.0
        %948 = vmatpush.msra.mxu0 0.0
        %949 = vmatpush.msra.mxu0 0.0
        %950 = vmatpush.msra.mxu0 0.0
        %951 = vmatpush.msra.mxu0 0.0
        %952 = vmatpush.msra.mxu0 0.0
        %953 = vmatpush.msra.mxu0 0.0
        %954 = vmatpush.msra.mxu0 0.0
        %955 = vmatpush.msra.mxu0 0.0
        %956 = vmatpush.msra.mxu0 0.0
        %957 = vmatpush.msra.mxu0 0.0
        %958 = vmatpush.msra.mxu0 %v935
        %959 = vmatpush.msra.mxu0 %v934
        %960 = vmatpush.msra.mxu0 %v933
        %961 = vmatpush.msra.mxu0 %v932
        %962 = vmatmul.f32.gmra.mxu0 %v941
        %v963 = vpop.f32.mrf.mxu0
        %v964 = vadd.f32 %v938, %v963
        %965 = vmatmul.f32.gmra.mxu0 %v944
        %v966 = vpop.f32.mrf.mxu0
        %v967 = vadd.f32 %v938, %v966
        %968 = vdwg.mxu0
        %v969 = vld [vmem:[%s2] sm:$0xff]
        %v970 = vld [vmem:[%s2 + $0x8] sm:$0xff]
        %973 = vrot.lane.b32.xlu0 %v964, 96
        %v974 = vpop.permute.xlu0 %973
        %975 = vrot.lane.b32.xlu0 %v967, 96
        %v976 = vpop.permute.xlu0 %975
        %vm977 = vcmask 64512
        %v978 = vsel %vm977, %v964, 0
        %v980 = vsel %vm977, %v967, 0
        %v982 = vsel %vm977, %v974, 0
        %v984 = vsel %vm977, %v976, 0
        %986 = vmatpush.xpose.msra.mxu0 0.0
        %987 = vmatpush.xpose.msra.mxu0 0.0
        %988 = vmatpush.xpose.msra.mxu0 0.0
        %989 = vmatpush.xpose.msra.mxu0 0.0
        %990 = vmatpush.xpose.msra.mxu0 0.0
        %991 = vmatpush.xpose.msra.mxu0 0.0
        %992 = vmatpush.xpose.msra.mxu0 0.0
        %993 = vmatpush.xpose.msra.mxu0 0.0
        %994 = vmatpush.xpose.msra.mxu0 0.0
        %995 = vmatpush.xpose.msra.mxu0 0.0
        %996 = vmatpush.xpose.msra.mxu0 0.0
        %997 = vmatpush.xpose.msra.mxu0 0.0
        %998 = vmatpush.xpose.msra.mxu0 0.0
        %999 = vmatpush.xpose.msra.mxu0 0.0
        %1000 = vmatpush.xpose.msra.mxu0 %v984
        %1001 = vmatpush.xpose.msra.mxu0 %v982
        %1002 = vmatmul.f32.gmra.mxu0 %v978
        %v1003 = vpop.f32.mrf.mxu0
        %v1004 = vadd.f32 0.0, %v1003
        %1005 = vmatmul.f32.gmra.mxu0 %v980
        %v1006 = vpop.f32.mrf.mxu0
        %v1007 = vadd.f32 0.0, %v1006
        %1008 = vdwg.mxu0
        %v1009 = vmul.f32 %v1004, 0.35355338
        %v1010 = vmul.f32 %v1007, 0.35355338
        %v1011 = vadd.f32 %v1009, %v969
        %v1012 = vadd.f32 %v1010, %v970
        %vm1013 = vcmask 130048
        %v1014 = vsel %vm1013, %v1011, -inf
        %1015 = vmax.xlane.f32.xlu0 %v1014
        %v1016 = vpop.xlane.xlu0 %1015
        %v1017 = vsel %vm1013, %v1012, -inf
        %1018 = vmax.xlane.f32.xlu0 %v1017
        %v1019 = vpop.xlane.xlu0 %1018
        %v1020 = vsub.f32 %v1011, %v1016
        %v1021 = vsub.f32 %v1012, %v1019
        %v1022 = vmul.f32 %v1020, 1.442695
        %v1023 = vpow.pop %v1022
        %v1024 = vmul.f32 %v1021, 1.442695
        %v1025 = vpow.pop %v1024
        %v1026 = vsel %vm1013, %v1023, 0.0
        %1027 = vadd.xlane.f32.xlu0 %v1026
        %v1028 = vpop.xlane.xlu0 %1027
        %v1029 = vsel %vm1013, %v1025, 0.0
        %1030 = vadd.xlane.f32.xlu0 %v1029
        %v1031 = vpop.xlane.xlu0 %1030
        %v1032 = vrcp.pop %v1028
        %v1033 = vrcp.pop %v1031
        %v1034 = vmul.f32 %v1023, %v1032
        %v1035 = vmul.f32 %v1025, %v1033
        %1036 = vrot.lane.b32.xlu0 %v964, 64
        %v1037 = vpop.permute.xlu0 %1036
        %1038 = vrot.lane.b32.xlu0 %v967, 64
        %v1039 = vpop.permute.xlu0 %1038
        %v1043 = vsel %vm1013, %v1034, 0
        %v1046 = vsel %vm1013, %v1035, 0
        %1048 = vmatpush.msra.mxu0 0.0
        %1049 = vmatpush.msra.mxu0 0.0
        %1050 = vmatpush.msra.mxu0 0.0
        %1051 = vmatpush.msra.mxu0 0.0
        %1052 = vmatpush.msra.mxu0 0.0
        %1053 = vmatpush.msra.mxu0 0.0
        %1054 = vmatpush.msra.mxu0 0.0
        %1055 = vmatpush.msra.mxu0 0.0
        %1056 = vmatpush.msra.mxu0 0.0
        %1057 = vmatpush.msra.mxu0 0.0
        %1058 = vmatpush.msra.mxu0 0.0
        %1059 = vmatpush.msra.mxu0 0.0
        %1060 = vmatpush.msra.mxu0 0.0
        %1061 = vmatpush.msra.mxu0 0.0
        %1062 = vmatpush.msra.mxu0 %v1039
        %1063 = vmatpush.msra.mxu0 %v1037
        %1064 = vmatmul.f32.gmra.mxu0 %v1043
        %v1065 = vpop.f32.mrf.mxu0
        %v1066 = vadd.f32 0.0, %v1065
        %1067 = vmatmul.f32.gmra.mxu0 %v1046
        %v1068 = vpop.f32.mrf.mxu0
        %v1069 = vadd.f32 0.0, %v1068
        %1070 = vdwg.mxu0
        %1071 = vrot.lane.b32.xlu0 %v964, 120
        %v1072 = vpop.permute.xlu0 %1071
        %1073 = vrot.lane.b32.xlu0 %v967, 120
        %v1074 = vpop.permute.xlu0 %1073
        %1075 = vrot.lane.b32.xlu0 %v964, 88
        %v1076 = vpop.permute.xlu0 %1075
        %1077 = vrot.lane.b32.xlu0 %v967, 88
        %v1078 = vpop.permute.xlu0 %1077
        %v1079 = vsel %vm977, %v1072, 0
        %v1081 = vsel %vm977, %v1074, 0
        %v1083 = vsel %vm977, %v1076, 0
        %v1085 = vsel %vm977, %v1078, 0
        %1087 = vmatpush.xpose.msra.mxu0 0.0
        %1088 = vmatpush.xpose.msra.mxu0 0.0
        %1089 = vmatpush.xpose.msra.mxu0 0.0
        %1090 = vmatpush.xpose.msra.mxu0 0.0
        %1091 = vmatpush.xpose.msra.mxu0 0.0
        %1092 = vmatpush.xpose.msra.mxu0 0.0
        %1093 = vmatpush.xpose.msra.mxu0 0.0
        %1094 = vmatpush.xpose.msra.mxu0 0.0
        %1095 = vmatpush.xpose.msra.mxu0 0.0
        %1096 = vmatpush.xpose.msra.mxu0 0.0
        %1097 = vmatpush.xpose.msra.mxu0 0.0
        %1098 = vmatpush.xpose.msra.mxu0 0.0
        %1099 = vmatpush.xpose.msra.mxu0 0.0
        %1100 = vmatpush.xpose.msra.mxu0 0.0
        %1101 = vmatpush.xpose.msra.mxu0 %v1085
        %1102 = vmatpush.xpose.msra.mxu0 %v1083
        %1103 = vmatmul.f32.gmra.mxu0 %v1079
        %v1104 = vpop.f32.mrf.mxu0
        %v1105 = vadd.f32 0.0, %v1104
        %1106 = vmatmul.f32.gmra.mxu0 %v1081
        %v1107 = vpop.f32.mrf.mxu0
        %v1108 = vadd.f32 0.0, %v1107
        %1109 = vdwg.mxu0
        %v1110 = vmul.f32 %v1105, 0.35355338
        %v1111 = vmul.f32 %v1108, 0.35355338
        %v1112 = vadd.f32 %v1110, %v969
        %v1113 = vadd.f32 %v1111, %v970
        %v1114 = vsel %vm1013, %v1112, -inf
        %1115 = vmax.xlane.f32.xlu0 %v1114
        %v1116 = vpop.xlane.xlu0 %1115
        %v1117 = vsel %vm1013, %v1113, -inf
        %1118 = vmax.xlane.f32.xlu0 %v1117
        %v1119 = vpop.xlane.xlu0 %1118
        %v1120 = vsub.f32 %v1112, %v1116
        %v1121 = vsub.f32 %v1113, %v1119
        %v1122 = vmul.f32 %v1120, 1.442695
        %v1123 = vpow.pop %v1122
        %v1124 = vmul.f32 %v1121, 1.442695
        %v1125 = vpow.pop %v1124
        %v1126 = vsel %vm1013, %v1123, 0.0
        %1127 = vadd.xlane.f32.xlu0 %v1126
        %v1128 = vpop.xlane.xlu0 %1127
        %v1129 = vsel %vm1013, %v1125, 0.0
        %1130 = vadd.xlane.f32.xlu0 %v1129
        %v1131 = vpop.xlane.xlu0 %1130
        %v1132 = vrcp.pop %v1128
        %v1133 = vrcp.pop %v1131
        %v1134 = vmul.f32 %v1123, %v1132
        %v1135 = vmul.f32 %v1125, %v1133
        %1136 = vrot.lane.b32.xlu0 %v964, 56
        %v1137 = vpop.permute.xlu0 %1136
        %1138 = vrot.lane.b32.xlu0 %v967, 56
        %v1139 = vpop.permute.xlu0 %1138
        %v1143 = vsel %vm1013, %v1134, 0
        %v1146 = vsel %vm1013, %v1135, 0
        %1148 = vmatpush.msra.mxu0 0.0
        %1149 = vmatpush.msra.mxu0 0.0
        %1150 = vmatpush.msra.mxu0 0.0
        %1151 = vmatpush.msra.mxu0 0.0
        %1152 = vmatpush.msra.mxu0 0.0
        %1153 = vmatpush.msra.mxu0 0.0
        %1154 = vmatpush.msra.mxu0 0.0
        %1155 = vmatpush.msra.mxu0 0.0
        %1156 = vmatpush.msra.mxu0 0.0
        %1157 = vmatpush.msra.mxu0 0.0
        %1158 = vmatpush.msra.mxu0 0.0
        %1159 = vmatpush.msra.mxu0 0.0
        %1160 = vmatpush.msra.mxu0 0.0
        %1161 = vmatpush.msra.mxu0 0.0
        %1162 = vmatpush.msra.mxu0 %v1139
        %1163 = vmatpush.msra.mxu0 %v1137
        %1164 = vmatmul.f32.gmra.mxu0 %v1143
        %v1165 = vpop.f32.mrf.mxu0
        %v1166 = vadd.f32 0.0, %v1165
        %1167 = vmatmul.f32.gmra.mxu0 %v1146
        %v1168 = vpop.f32.mrf.mxu0
        %v1169 = vadd.f32 0.0, %v1168
        %1170 = vdwg.mxu0
        %1171 = vrot.lane.b32.xlu0 %v964, 112
        %v1172 = vpop.permute.xlu0 %1171
        %1173 = vrot.lane.b32.xlu0 %v967, 112
        %v1174 = vpop.permute.xlu0 %1173
        %1175 = vrot.lane.b32.xlu0 %v964, 80
        %v1176 = vpop.permute.xlu0 %1175
        %1177 = vrot.lane.b32.xlu0 %v967, 80
        %v1178 = vpop.permute.xlu0 %1177
        %v1179 = vsel %vm977, %v1172, 0
        %v1181 = vsel %vm977, %v1174, 0
        %v1183 = vsel %vm977, %v1176, 0
        %v1185 = vsel %vm977, %v1178, 0
        %1187 = vmatpush.xpose.msra.mxu0 0.0
        %1188 = vmatpush.xpose.msra.mxu0 0.0
        %1189 = vmatpush.xpose.msra.mxu0 0.0
        %1190 = vmatpush.xpose.msra.mxu0 0.0
        %1191 = vmatpush.xpose.msra.mxu0 0.0
        %1192 = vmatpush.xpose.msra.mxu0 0.0
        %1193 = vmatpush.xpose.msra.mxu0 0.0
        %1194 = vmatpush.xpose.msra.mxu0 0.0
        %1195 = vmatpush.xpose.msra.mxu0 0.0
        %1196 = vmatpush.xpose.msra.mxu0 0.0
        %1197 = vmatpush.xpose.msra.mxu0 0.0
        %1198 = vmatpush.xpose.msra.mxu0 0.0
        %1199 = vmatpush.xpose.msra.mxu0 0.0
        %1200 = vmatpush.xpose.msra.mxu0 0.0
        %1201 = vmatpush.xpose.msra.mxu0 %v1185
        %1202 = vmatpush.xpose.msra.mxu0 %v1183
        %1203 = vmatmul.f32.gmra.mxu0 %v1179
        %v1204 = vpop.f32.mrf.mxu0
        %v1205 = vadd.f32 0.0, %v1204
        %1206 = vmatmul.f32.gmra.mxu0 %v1181
        %v1207 = vpop.f32.mrf.mxu0
        %v1208 = vadd.f32 0.0, %v1207
        %1209 = vdwg.mxu0
        %v1210 = vmul.f32 %v1205, 0.35355338
        %v1211 = vmul.f32 %v1208, 0.35355338
        %v1212 = vadd.f32 %v1210, %v969
        %v1213 = vadd.f32 %v1211, %v970
        %v1214 = vsel %vm1013, %v1212, -inf
        %1215 = vmax.xlane.f32.xlu0 %v1214
        %v1216 = vpop.xlane.xlu0 %1215
        %v1217 = vsel %vm1013, %v1213, -inf
        %1218 = vmax.xlane.f32.xlu0 %v1217
        %v1219 = vpop.xlane.xlu0 %1218
        %v1220 = vsub.f32 %v1212, %v1216
        %v1221 = vsub.f32 %v1213, %v1219
        %v1222 = vmul.f32 %v1220, 1.442695
        %v1223 = vpow.pop %v1222
        %v1224 = vmul.f32 %v1221, 1.442695
        %v1225 = vpow.pop %v1224
        %v1226 = vsel %vm1013, %v1223, 0.0
        %1227 = vadd.xlane.f32.xlu0 %v1226
        %v1228 = vpop.xlane.xlu0 %1227
        %v1229 = vsel %vm1013, %v1225, 0.0
        %1230 = vadd.xlane.f32.xlu0 %v1229
        %v1231 = vpop.xlane.xlu0 %1230
        %v1232 = vrcp.pop %v1228
        %v1233 = vrcp.pop %v1231
        %v1234 = vmul.f32 %v1223, %v1232
        %v1235 = vmul.f32 %v1225, %v1233
        %1236 = vrot.lane.b32.xlu0 %v964, 48
        %v1237 = vpop.permute.xlu0 %1236
        %1238 = vrot.lane.b32.xlu0 %v967, 48
        %v1239 = vpop.permute.xlu0 %1238
        %v1243 = vsel %vm1013, %v1234, 0
        %v1246 = vsel %vm1013, %v1235, 0
        %1248 = vmatpush.msra.mxu0 0.0
        %1249 = vmatpush.msra.mxu0 0.0
        %1250 = vmatpush.msra.mxu0 0.0
        %1251 = vmatpush.msra.mxu0 0.0
        %1252 = vmatpush.msra.mxu0 0.0
        %1253 = vmatpush.msra.mxu0 0.0
        %1254 = vmatpush.msra.mxu0 0.0
        %1255 = vmatpush.msra.mxu0 0.0
        %1256 = vmatpush.msra.mxu0 0.0
        %1257 = vmatpush.msra.mxu0 0.0
        %1258 = vmatpush.msra.mxu0 0.0
        %1259 = vmatpush.msra.mxu0 0.0
        %1260 = vmatpush.msra.mxu0 0.0
        %1261 = vmatpush.msra.mxu0 0.0
        %1262 = vmatpush.msra.mxu0 %v1239
        %1263 = vmatpush.msra.mxu0 %v1237
        %1264 = vmatmul.f32.gmra.mxu0 %v1243
        %v1265 = vpop.f32.mrf.mxu0
        %v1266 = vadd.f32 0.0, %v1265
        %1267 = vmatmul.f32.gmra.mxu0 %v1246
        %v1268 = vpop.f32.mrf.mxu0
        %v1269 = vadd.f32 0.0, %v1268
        %1270 = vdwg.mxu0
        %1271 = vrot.lane.b32.xlu0 %v964, 104
        %v1272 = vpop.permute.xlu0 %1271
        %1273 = vrot.lane.b32.xlu0 %v967, 104
        %v1274 = vpop.permute.xlu0 %1273
        %1275 = vrot.lane.b32.xlu0 %v964, 72
        %v1276 = vpop.permute.xlu0 %1275
        %1277 = vrot.lane.b32.xlu0 %v967, 72
        %v1278 = vpop.permute.xlu0 %1277
        %v1279 = vsel %vm977, %v1272, 0
        %v1281 = vsel %vm977, %v1274, 0
        %v1283 = vsel %vm977, %v1276, 0
        %v1285 = vsel %vm977, %v1278, 0
        %1287 = vmatpush.xpose.msra.mxu0 0.0
        %1288 = vmatpush.xpose.msra.mxu0 0.0
        %1289 = vmatpush.xpose.msra.mxu0 0.0
        %1290 = vmatpush.xpose.msra.mxu0 0.0
        %1291 = vmatpush.xpose.msra.mxu0 0.0
        %1292 = vmatpush.xpose.msra.mxu0 0.0
        %1293 = vmatpush.xpose.msra.mxu0 0.0
        %1294 = vmatpush.xpose.msra.mxu0 0.0
        %1295 = vmatpush.xpose.msra.mxu0 0.0
        %1296 = vmatpush.xpose.msra.mxu0 0.0
        %1297 = vmatpush.xpose.msra.mxu0 0.0
        %1298 = vmatpush.xpose.msra.mxu0 0.0
        %1299 = vmatpush.xpose.msra.mxu0 0.0
        %1300 = vmatpush.xpose.msra.mxu0 0.0
        %1301 = vmatpush.xpose.msra.mxu0 %v1285
        %1302 = vmatpush.xpose.msra.mxu0 %v1283
        %1303 = vmatmul.f32.gmra.mxu0 %v1279
        %v1304 = vpop.f32.mrf.mxu0
        %v1305 = vadd.f32 0.0, %v1304
        %1306 = vmatmul.f32.gmra.mxu0 %v1281
        %v1307 = vpop.f32.mrf.mxu0
        %v1308 = vadd.f32 0.0, %v1307
        %1309 = vdwg.mxu0
        %v1310 = vmul.f32 %v1305, 0.35355338
        %v1311 = vmul.f32 %v1308, 0.35355338
        %v1312 = vadd.f32 %v1310, %v969
        %v1313 = vadd.f32 %v1311, %v970
        %v1314 = vsel %vm1013, %v1312, -inf
        %1315 = vmax.xlane.f32.xlu0 %v1314
        %v1316 = vpop.xlane.xlu0 %1315
        %v1317 = vsel %vm1013, %v1313, -inf
        %1318 = vmax.xlane.f32.xlu0 %v1317
        %v1319 = vpop.xlane.xlu0 %1318
        %v1320 = vsub.f32 %v1312, %v1316
        %v1321 = vsub.f32 %v1313, %v1319
        %v1322 = vmul.f32 %v1320, 1.442695
        %v1323 = vpow.pop %v1322
        %v1324 = vmul.f32 %v1321, 1.442695
        %v1325 = vpow.pop %v1324
        %v1326 = vsel %vm1013, %v1323, 0.0
        %1327 = vadd.xlane.f32.xlu0 %v1326
        %v1328 = vpop.xlane.xlu0 %1327
        %v1329 = vsel %vm1013, %v1325, 0.0
        %1330 = vadd.xlane.f32.xlu0 %v1329
        %v1331 = vpop.xlane.xlu0 %1330
        %v1332 = vrcp.pop %v1328
        %v1333 = vrcp.pop %v1331
        %v1334 = vmul.f32 %v1323, %v1332
        %v1335 = vmul.f32 %v1325, %v1333
        %1336 = vrot.lane.b32.xlu0 %v964, 40
        %v1337 = vpop.permute.xlu0 %1336
        %1338 = vrot.lane.b32.xlu0 %v967, 40
        %v1339 = vpop.permute.xlu0 %1338
        %v1343 = vsel %vm1013, %v1334, 0
        %v1346 = vsel %vm1013, %v1335, 0
        %1348 = vmatpush.msra.mxu0 0.0
        %1349 = vmatpush.msra.mxu0 0.0
        %1350 = vmatpush.msra.mxu0 0.0
        %1351 = vmatpush.msra.mxu0 0.0
        %1352 = vmatpush.msra.mxu0 0.0
        %1353 = vmatpush.msra.mxu0 0.0
        %1354 = vmatpush.msra.mxu0 0.0
        %1355 = vmatpush.msra.mxu0 0.0
        %1356 = vmatpush.msra.mxu0 0.0
        %1357 = vmatpush.msra.mxu0 0.0
        %1358 = vmatpush.msra.mxu0 0.0
        %1359 = vmatpush.msra.mxu0 0.0
        %1360 = vmatpush.msra.mxu0 0.0
        %1361 = vmatpush.msra.mxu0 0.0
        %1362 = vmatpush.msra.mxu0 %v1339
        %1363 = vmatpush.msra.mxu0 %v1337
        %1364 = vmatmul.f32.gmra.mxu0 %v1343
        %v1365 = vpop.f32.mrf.mxu0
        %v1366 = vadd.f32 0.0, %v1365
        %1367 = vmatmul.f32.gmra.mxu0 %v1346
        %v1368 = vpop.f32.mrf.mxu0
        %v1369 = vadd.f32 0.0, %v1368
        %1370 = vdwg.mxu0
        %1373 = vrot.lane.b32.xlu0 %v1166, 8
        %v1374 = vpop.permute.xlu0 %1373
        %1375 = vrot.lane.b32.xlu0 %v1169, 8
        %v1376 = vpop.permute.xlu0 %1375
        %1381 = vrot.lane.b32.xlu0 %v1266, 16
        %v1382 = vpop.permute.xlu0 %1381
        %1383 = vrot.lane.b32.xlu0 %v1269, 16
        %v1384 = vpop.permute.xlu0 %1383
        %1389 = vrot.lane.b32.xlu0 %v1366, 24
        %v1390 = vpop.permute.xlu0 %1389
        %1391 = vrot.lane.b32.xlu0 %v1369, 24
        %v1392 = vpop.permute.xlu0 %1391
        %v1395 = vsel %vm977, %v1066, %v1374
        %v1396 = vsel %vm977, %v1069, %v1376
        %v1397 = vsel %vm1013, %v1395, %v1382
        %v1398 = vsel %vm1013, %v1396, %v1384
        %vm1399 = vcmask 195584
        %v1400 = vsel %vm1399, %v1397, %v1390
        %v1401 = vsel %vm1399, %v1398, %v1392
        %v1402 = vld [vmem:[%s789] sm:$0xff]
        %v1403 = vld [vmem:[%s789 + $0x8] sm:$0xff]
        %v1404 = vld [vmem:[%s789 + $0x10] sm:$0xff]
        %v1405 = vld [vmem:[%s789 + $0x18] sm:$0xff]
        %v1406 = vld [vmem:[%s792] sm:$0x1]
        %v1408 = vperm.slane %v1406, 0
        %v1411 = vsel %vm870, %v1400, 0
        %v1414 = vsel %vm870, %v1401, 0
        %1416 = vmatpush.msra.mxu0 0.0
        %1417 = vmatpush.msra.mxu0 0.0
        %1418 = vmatpush.msra.mxu0 0.0
        %1419 = vmatpush.msra.mxu0 0.0
        %1420 = vmatpush.msra.mxu0 0.0
        %1421 = vmatpush.msra.mxu0 0.0
        %1422 = vmatpush.msra.mxu0 0.0
        %1423 = vmatpush.msra.mxu0 0.0
        %1424 = vmatpush.msra.mxu0 0.0
        %1425 = vmatpush.msra.mxu0 0.0
        %1426 = vmatpush.msra.mxu0 0.0
        %1427 = vmatpush.msra.mxu0 0.0
        %1428 = vmatpush.msra.mxu0 %v1405
        %1429 = vmatpush.msra.mxu0 %v1404
        %1430 = vmatpush.msra.mxu0 %v1403
        %1431 = vmatpush.msra.mxu0 %v1402
        %1432 = vmatmul.f32.gmra.mxu0 %v1411
        %v1433 = vpop.f32.mrf.mxu0
        %v1434 = vadd.f32 %v1408, %v1433
        %1435 = vmatmul.f32.gmra.mxu0 %v1414
        %v1436 = vpop.f32.mrf.mxu0
        %v1437 = vadd.f32 %v1408, %v1436
        %1438 = vdwg.mxu0
        %v1439 = vadd.f32 %v866, %v1434
        %v1440 = vadd.f32 %v867, %v1437
        %v1441 = vld [vmem:[%s795] sm:$0x1]
        %v1442 = vld [vmem:[%s798] sm:$0x1]
        %v1443 = vsel %vm870, %v1439, 0.0
        %1444 = vadd.xlane.f32.xlu0 %v1443
        %v1445 = vpop.xlane.xlu0 %1444
        %v1446 = vsel %vm870, %v1440, 0.0
        %1447 = vadd.xlane.f32.xlu0 %v1446
        %v1448 = vpop.xlane.xlu0 %1447
        %v1449 = vmul.f32 %v1445, %v883
        %v1450 = vmul.f32 %v1448, %v883
        %v1451 = vsub.f32 %v1439, %v1449
        %v1452 = vsub.f32 %v1440, %v1450
        %v1453 = vmul.f32 %v1451, %v1451
        %v1454 = vmul.f32 %v1452, %v1452
        %v1455 = vsel %vm870, %v1453, 0.0
        %1456 = vadd.xlane.f32.xlu0 %v1455
        %v1457 = vpop.xlane.xlu0 %1456
        %v1458 = vsel %vm870, %v1454, 0.0
        %1459 = vadd.xlane.f32.xlu0 %v1458
        %v1460 = vpop.xlane.xlu0 %1459
        %v1461 = vmul.f32 %v1457, %v883
        %v1462 = vmul.f32 %v1460, %v883
        %v1463 = vadd.f32 %v1461, 1e-05
        %v1464 = vadd.f32 %v1462, 1e-05
        %v1465 = vrsqrt.pop %v1463
        %v1466 = vmul.f32 %v1465, %v1463
        %v1467 = vmul.f32 %v1466, %v1465
        %v1468 = vmul.f32 0.5, %v1467
        %v1469 = vsub.f32 1.5, %v1468
        %v1470 = vmul.f32 %v1465, %v1469
        %vm1471 = vweird.f32 %v1463
        %vm1472 = vweird.f32 %v1465
        %vm1473 = vmor %vm1471, %vm1472
        %v1474 = vsel %vm1473, %v1465, %v1470
        %v1475 = vrsqrt.pop %v1464
        %v1476 = vmul.f32 %v1475, %v1464
        %v1477 = vmul.f32 %v1476, %v1475
        %v1478 = vmul.f32 0.5, %v1477
        %v1479 = vsub.f32 1.5, %v1478
        %v1480 = vmul.f32 %v1475, %v1479
        %vm1481 = vweird.f32 %v1464
        %vm1482 = vweird.f32 %v1475
        %vm1483 = vmor %vm1481, %vm1482
        %v1484 = vsel %vm1483, %v1475, %v1480
        %v1485 = vmul.f32 %v1451, %v1474
        %v1486 = vmul.f32 %v1452, %v1484
        %v1488 = vperm.slane %v1441, 0
        %v1490 = vmul.f32 %v1485, %v1488
        %v1491 = vmul.f32 %v1486, %v1488
        %v1493 = vperm.slane %v1442, 0
        %v1495 = vadd.f32 %v1490, %v1493
        %v1496 = vadd.f32 %v1491, %v1493
        %v1497 = vld [vmem:[%s803] sm:$0xff]
        %v1498 = vld [vmem:[%s803 + $0x8] sm:$0xff]
        %v1499 = vld [vmem:[%s803 + $0x10] sm:$0xff]
        %v1500 = vld [vmem:[%s803 + $0x18] sm:$0xff]
        %v1501 = vld [vmem:[%s806] sm:$0x1]
        %v1503 = vperm.slane %v1501, 0
        %v1506 = vsel %vm870, %v1495, 0
        %v1509 = vsel %vm870, %v1496, 0
        %1511 = vmatpush.msra.mxu0 0.0
        %1512 = vmatpush.msra.mxu0 0.0
        %1513 = vmatpush.msra.mxu0 0.0
        %1514 = vmatpush.msra.mxu0 0.0
        %1515 = vmatpush.msra.mxu0 0.0
        %1516 = vmatpush.msra.mxu0 0.0
        %1517 = vmatpush.msra.mxu0 0.0
        %1518 = vmatpush.msra.mxu0 0.0
        %1519 = vmatpush.msra.mxu0 0.0
        %1520 = vmatpush.msra.mxu0 0.0
        %1521 = vmatpush.msra.mxu0 0.0
        %1522 = vmatpush.msra.mxu0 0.0
        %1523 = vmatpush.msra.mxu0 %v1500
        %1524 = vmatpush.msra.mxu0 %v1499
        %1525 = vmatpush.msra.mxu0 %v1498
        %1526 = vmatpush.msra.mxu0 %v1497
        %1527 = vmatmul.f32.gmra.mxu0 %v1506
        %v1528 = vpop.f32.mrf.mxu0
        %v1529 = vadd.f32 %v1503, %v1528
        %1530 = vmatmul.f32.gmra.mxu0 %v1509
        %v1531 = vpop.f32.mrf.mxu0
        %v1532 = vadd.f32 %v1503, %v1531
        %1533 = vdwg.mxu0
        %v1534 = vmul.f32 %v1529, 0.5
        %v1535 = vmul.f32 %v1532, 0.5
        %v1536 = vmul.f32 %v1529, 0.044715
        %v1537 = vmul.f32 %v1532, 0.044715
        %v1538 = vmul.f32 %v1536, %v1529
        %v1539 = vmul.f32 %v1537, %v1532
        %v1540 = vmul.f32 %v1538, %v1529
        %v1541 = vmul.f32 %v1539, %v1532
        %v1542 = vadd.f32 %v1529, %v1540
        %v1543 = vadd.f32 %v1532, %v1541
        %v1544 = vmul.f32 %v1542, 0.7978846
        %v1545 = vmul.f32 %v1543, 0.7978846
        %v1546 = vtanh.pop %v1544
        %v1547 = vtanh.pop %v1545
        %v1548 = vadd.f32 %v1546, 1.0
        %v1549 = vadd.f32 %v1547, 1.0
        %v1550 = vmul.f32 %v1534, %v1548
        %v1551 = vmul.f32 %v1535, %v1549
        %v1552 = vld [vmem:[%s811] sm:$0xff]
        %v1553 = vld [vmem:[%s811 + $0x8] sm:$0xff]
        %v1554 = vld [vmem:[%s811 + $0x10] sm:$0xff]
        %v1555 = vld [vmem:[%s811 + $0x18] sm:$0xff]
        %v1556 = vld [vmem:[%s811 + $0x20] sm:$0xff]
        %v1557 = vld [vmem:[%s811 + $0x28] sm:$0xff]
        %v1558 = vld [vmem:[%s811 + $0x30] sm:$0xff]
        %v1559 = vld [vmem:[%s811 + $0x38] sm:$0xff]
        %v1560 = vld [vmem:[%s811 + $0x40] sm:$0xff]
        %v1561 = vld [vmem:[%s811 + $0x48] sm:$0xff]
        %v1562 = vld [vmem:[%s811 + $0x50] sm:$0xff]
        %v1563 = vld [vmem:[%s811 + $0x58] sm:$0xff]
        %v1564 = vld [vmem:[%s811 + $0x60] sm:$0xff]
        %v1565 = vld [vmem:[%s811 + $0x68] sm:$0xff]
        %v1566 = vld [vmem:[%s811 + $0x70] sm:$0xff]
        %v1567 = vld [vmem:[%s811 + $0x78] sm:$0xff]
        %1568 = vmatpush.msra.mxu0 %v1567
        %1569 = vmatpush.msra.mxu0 %v1566
        %1570 = vmatpush.msra.mxu0 %v1565
        %1571 = vmatpush.msra.mxu0 %v1564
        %1572 = vmatpush.msra.mxu0 %v1563
        %1573 = vmatpush.msra.mxu0 %v1562
        %1574 = vmatpush.msra.mxu0 %v1561
        %1575 = vmatpush.msra.mxu0 %v1560
        %1576 = vmatpush.msra.mxu0 %v1559
        %1577 = vmatpush.msra.mxu0 %v1558
        %1578 = vmatpush.msra.mxu0 %v1557
        %1579 = vmatpush.msra.mxu0 %v1556
        %1580 = vmatpush.msra.mxu0 %v1555
        %1581 = vmatpush.msra.mxu0 %v1554
        %1582 = vmatpush.msra.mxu0 %v1553
        %1583 = vmatpush.msra.mxu0 %v1552
        %1584 = vmatmul.f32.gmra.mxu0 %v1550
        %v1585 = vpop.f32.mrf.mxu0
        %v1586 = vadd.f32 0.0, %v1585
        %1587 = vmatmul.f32.gmra.mxu0 %v1551
        %v1588 = vpop.f32.mrf.mxu0
        %v1589 = vadd.f32 0.0, %v1588
        %1590 = vdwg.mxu0
        %v1591 = vadd.f32 %v1439, %v1586
        %v1592 = vadd.f32 %v1440, %v1589
        %v1593 = vld [vmem:[%s814] sm:$0x1]
        %v1595 = vperm.slane %v1593, 0
        %v1597 = vadd.f32 %v1591, %v1595
        %v1598 = vadd.f32 %v1592, %v1595
        %1599 = vst.msk [vmem:[#allocation2] sm:$0xff] %vm870, %v1597
        %1600 = vst.msk [vmem:[#allocation2 + $0x8] sm:$0xff] %vm870, %v1598
        %p1601 = scmp.eq.s32.totalorder %s33, 1
        // Predicated region
        $region109: #{tpu_custom_call.1} parent=103 // pred_check
          %p1602 = pneg %p1601
        $region110: #{tpu_custom_call.1} parent=103 // pred_check_branch
          %1604 = sbr.rel (%p1602) target = $region112
        $region111: #{tpu_custom_call.1} parent=103 // pred_region
          %v1605 = vld [vmem:[%s17] sm:$0x1]
          %v1606 = vld [vmem:[%s18] sm:$0x1]
          %v1607 = vsel %vm870, %v1597, 0.0
          %1608 = vadd.xlane.f32.xlu0 %v1607
          %v1609 = vpop.xlane.xlu0 %1608
          %v1610 = vsel %vm870, %v1598, 0.0
          %1611 = vadd.xlane.f32.xlu0 %v1610
          %v1612 = vpop.xlane.xlu0 %1611
          %v1613 = vmul.f32 %v1609, %v883
          %v1614 = vmul.f32 %v1612, %v883
          %v1615 = vsub.f32 %v1597, %v1613
          %v1616 = vsub.f32 %v1598, %v1614
          %v1617 = vmul.f32 %v1615, %v1615
          %v1618 = vmul.f32 %v1616, %v1616
          %v1619 = vsel %vm870, %v1617, 0.0
          %1620 = vadd.xlane.f32.xlu0 %v1619
          %v1621 = vpop.xlane.xlu0 %1620
          %v1622 = vsel %vm870, %v1618, 0.0
          %1623 = vadd.xlane.f32.xlu0 %v1622
          %v1624 = vpop.xlane.xlu0 %1623
          %v1625 = vmul.f32 %v1621, %v883
          %v1626 = vmul.f32 %v1624, %v883
          %v1627 = vadd.f32 %v1625, 1e-05
          %v1628 = vadd.f32 %v1626, 1e-05
          %v1629 = vrsqrt.pop %v1627
          %v1630 = vmul.f32 %v1629, %v1627
          %v1631 = vmul.f32 %v1630, %v1629
          %v1632 = vmul.f32 0.5, %v1631
          %v1633 = vsub.f32 1.5, %v1632
          %v1634 = vmul.f32 %v1629, %v1633
          %vm1635 = vweird.f32 %v1627
          %vm1636 = vweird.f32 %v1629
          %vm1637 = vmor %vm1635, %vm1636
          %v1638 = vsel %vm1637, %v1629, %v1634
          %v1639 = vrsqrt.pop %v1628
          %v1640 = vmul.f32 %v1639, %v1628
          %v1641 = vmul.f32 %v1640, %v1639
          %v1642 = vmul.f32 0.5, %v1641
          %v1643 = vsub.f32 1.5, %v1642
          %v1644 = vmul.f32 %v1639, %v1643
          %vm1645 = vweird.f32 %v1628
          %vm1646 = vweird.f32 %v1639
          %vm1647 = vmor %vm1645, %vm1646
          %v1648 = vsel %vm1647, %v1639, %v1644
          %v1649 = vmul.f32 %v1615, %v1638
          %v1650 = vmul.f32 %v1616, %v1648
          %v1652 = vperm.slane %v1605, 0
          %v1654 = vmul.f32 %v1649, %v1652
          %v1655 = vmul.f32 %v1650, %v1652
          %v1657 = vperm.slane %v1606, 0
          %v1659 = vadd.f32 %v1654, %v1657
          %v1660 = vadd.f32 %v1655, %v1657
          %v1661 = vld [vmem:[%s19] sm:$0xff]
          %v1662 = vld [vmem:[%s19 + $0x8] sm:$0xff]
          %v1663 = vld [vmem:[%s19 + $0x10] sm:$0xff]
          %v1664 = vld [vmem:[%s19 + $0x18] sm:$0xff]
          %v1665 = vld [vmem:[%s20] sm:$0x1]
          %v1667 = vperm.slane %v1665, 0
          %v1670 = vsel %vm870, %v1659, 0
          %v1673 = vsel %vm870, %v1660, 0
          %1675 = vmatpush.msra.mxu0 0.0
          %1676 = vmatpush.msra.mxu0 0.0
          %1677 = vmatpush.msra.mxu0 0.0
          %1678 = vmatpush.msra.mxu0 0.0
          %1679 = vmatpush.msra.mxu0 0.0
          %1680 = vmatpush.msra.mxu0 0.0
          %1681 = vmatpush.msra.mxu0 0.0
          %1682 = vmatpush.msra.mxu0 0.0
          %1683 = vmatpush.msra.mxu0 0.0
          %1684 = vmatpush.msra.mxu0 0.0
          %1685 = vmatpush.msra.mxu0 0.0
          %1686 = vmatpush.msra.mxu0 0.0
          %1687 = vmatpush.msra.mxu0 %v1664
          %1688 = vmatpush.msra.mxu0 %v1663
          %1689 = vmatpush.msra.mxu0 %v1662
          %1690 = vmatpush.msra.mxu0 %v1661
          %1691 = vmatmul.f32.gmra.mxu0 %v1670
          %v1692 = vpop.f32.mrf.mxu0
          %v1693 = vadd.f32 %v1667, %v1692
          %1694 = vmatmul.f32.gmra.mxu0 %v1673
          %v1695 = vpop.f32.mrf.mxu0
          %v1696 = vadd.f32 %v1667, %v1695
          %1697 = vdwg.mxu0
          %v1698 = vtanh.pop %v1693
          %v1699 = vtanh.pop %v1696
          %1700 = vst [vmem:[#allocation3] sm:$0xff] %v1698
          %1701 = vst [vmem:[#allocation3 + $0x8] sm:$0xff] %v1699
        $region112: #{tpu_custom_call.1} parent=103 // pred_fallthru
          _
        // Predicated region
        $region113: #{tpu_custom_call.1} parent=103 // pred_check
          %p1702 = pneg %p547
        $region114: #{tpu_custom_call.1} parent=103 // pred_check_branch
          %1704 = sbr.rel (%p1702) target = $region116
        $region115: #{tpu_custom_call.1} parent=103 // pred_region
          %1706 = vsyncadd [#allocation4], 0
          %s1707 = sshll.u32 [#allocation3], 4
          %s1708 = int_to_ptr.vmem [resolvable:$true] %s1707
          %s1709 = sshll.u32 %s21, 4
          %s1710 = int_to_ptr.hbm [resolvable:$true] %s1709
          %1715 = dma.vmem_to_hbm [thread:$0]  %s1708, 256, %s1710, [#allocation4], 128, 128, 8
        $region116: #{tpu_custom_call.1} parent=103 // pred_fallthru
          _
        // Predicated region
        $region117: #{tpu_custom_call.1} parent=103 // pred_check
          %p1716 = pneg %p547
        $region118: #{tpu_custom_call.1} parent=103 // pred_check_branch
          %1718 = sbr.rel (%p1716) target = $region120
        $region119: #{tpu_custom_call.1} parent=103 // pred_region
          %1720 = dma.done [#allocation4], 256
        $region120: #{tpu_custom_call.1} parent=103 // pred_fallthru
          _
      $region104: #{tpu_custom_call.1} parent=5 // pred_fallthru
        _
      %p1721 = scmp.le.s32.totalorder 2, %s28
      // Predicated region
      $region121: #{tpu_custom_call.1} parent=5 // pred_check
        %p1722 = pneg %p1721
      $region122: #{tpu_custom_call.1} parent=5 // pred_check_branch
        %1724 = sbr.rel (%p1722) target = $region124
      $region123: #{tpu_custom_call.1} parent=5 // pred_region
        %s1725 = ssub.s32 %s28, 2
      $region124: #{tpu_custom_call.1} parent=5 // pred_fallthru
        _
    $region6: #{tpu_custom_call.1} parent=1 // loop_footer
      %s32 = sadd.s32 1, %s28
    $region7: #{tpu_custom_call.1} parent=1 // loop_footer_branch
      %27 = sbr.rel target = $region3
    $region8: #{tpu_custom_call.1} parent=1 // loop_exit
      _
    %1726 = vsyncpa [#allocation4], 1
    %s1727 = scalar_lea.sflag [#allocation4], 1
    %1728 = vsyncpa %s1727, 1

</llo_original>
